<compile_context>
chip_gen: v7x
topology: tpu7x:2x2x1
jax: 0.10.0
libtpu: 0.0.40
codegen_flags: <defaults>
</compile_context>

<pallas_src>
import math

import jax
import jax.numpy as jnp
from jax.experimental import pallas as pl
from jax.experimental.pallas import tpu as pltpu

# ----------------------------- model dims ---------------------------------
B = 2            # batch
C_IN = 4         # image channels
H = W = 16       # spatial
D = 32           # model / feature dim
T = 8            # target sequence length
VOCAB = 64       # vocabulary size
KH = KW = 3      # conv kernel

S = H * W                    # encoder sequence length (256)
KRAW = C_IN * KH * KW        # raw im2col K dim (36)
KPAD = 64                    # padded im2col K dim (lane/sublane friendly)
D2 = 2 * D                   # concatenated K|V width (64) == padded-Q width
VPAD = 128                   # vocab padded to a full lane width
SCALE = 1.0 / math.sqrt(D)


# ------------------------- fused Pallas kernel -----------------------------
def _fused_kernel(tgt_ref, patches_ref,
                  emb_ref,
                  wconv_ref, bconv_ref,
                  wq_ref, bq_ref,
                  wkv_ref, bkv_ref,
                  wout_ref, bout_ref,
                  out_ref):
    """One grid step == one batch element. All intermediates live in vregs/VMEM."""
    patches = patches_ref[0]                                   # [S, KPAD] bf16
    tgt = tgt_ref[0]                                           # [T, 1]    int32

    # ---- encoder: conv-as-matmul + bias + ReLU (f32 accumulate & elementwise) ----
    feat = jnp.dot(patches, wconv_ref[...],
                   preferred_element_type=jnp.float32)         # [S, D] f32
    feat = jnp.maximum(feat + bconv_ref[...], 0.0)

    # ---- token embedding as one-hot matmul (exact bf16 row select, runs on MXU) ----
    vocab_iota = jax.lax.broadcasted_iota(jnp.int32, (T, VOCAB), 1)
    onehot = (tgt == vocab_iota).astype(jnp.bfloat16)          # [T, VOCAB]
    temb = jnp.dot(onehot, emb_ref[...],
                   preferred_element_type=jnp.float32)         # [T, D] f32 (exact bf16 rows)

    # ---- decoder: K|V projection in a single matmul (lane width 2D) ----
    kv = jnp.dot(feat.astype(jnp.bfloat16), wkv_ref[...],
                 preferred_element_type=jnp.float32) + bkv_ref[...]   # [S, 2D] f32
    kv_b = kv.astype(jnp.bfloat16)

    # ---- Q projection, zero-padded to 2D lanes; 1/sqrt(D) folded into wq/bq ----
    q = jnp.dot(temb.astype(jnp.bfloat16), wq_ref[...],
                preferred_element_type=jnp.float32) + bq_ref[...]     # [T, 2D] f32
    q_b = q.astype(jnp.bfloat16)

    # ---- cross-attention ----
    # Contract the last dims directly (no explicit k.T materialization).
    # The V-half of q_b is exactly zero, so this equals (Q . K^T) * SCALE.
    scores = jax.lax.dot_general(
        q_b, kv_b, dimension_numbers=(((1,), (1,)), ((), ())),
        preferred_element_type=jnp.float32)                    # [T, S] f32
    m = scores.max(axis=-1, keepdims=True)
    p = jnp.exp(scores - m)
    denom = p.sum(axis=-1, keepdims=True)
    attn = p * pl.reciprocal(denom, approx=True)               # EUP slot, ~free

    # ctx = attn @ [K|V]; the K-half is junk and is masked out by the zero rows
    # of the padded vocab weight below.
    ctx = jnp.dot(attn.astype(jnp.bfloat16), kv_b,
                  preferred_element_type=jnp.float32)          # [T, 2D] f32

    logits = jnp.dot(ctx.astype(jnp.bfloat16), wout_ref[...],
                     preferred_element_type=jnp.float32) + bout_ref[...]  # [T, VPAD]
    out_ref[0] = logits.astype(out_ref.dtype)


def fused_forward(tgt3, patches, kp):
    """tgt3: [B, T, 1] int32, patches: [B, S, KPAD] bf16 -> logits_pad [B, T, VPAD] f32."""
    return pl.pallas_call(
        _fused_kernel,
        out_shape=jax.ShapeDtypeStruct((B, T, VPAD), jnp.float32),
        grid=(B,),
        in_specs=[
            pl.BlockSpec((1, T, 1), lambda b: (b, 0, 0)),      # token ids (per batch)
            pl.BlockSpec((1, S, KPAD), lambda b: (b, 0, 0)),   # im2col patches (per batch)
            pl.BlockSpec((VOCAB, D), lambda b: (0, 0)),        # embedding table
            pl.BlockSpec((KPAD, D), lambda b: (0, 0)),         # conv weight (padded K)
            pl.BlockSpec((1, D), lambda b: (0, 0)),            # conv bias
            pl.BlockSpec((D, D2), lambda b: (0, 0)),           # wq padded to 2D lanes (+scale)
            pl.BlockSpec((1, D2), lambda b: (0, 0)),           # bq padded (+scale)
            pl.BlockSpec((D, D2), lambda b: (0, 0)),           # [wk | wv]
            pl.BlockSpec((1, D2), lambda b: (0, 0)),           # [bk | bv]
            pl.BlockSpec((D2, VPAD), lambda b: (0, 0)),        # vocab head (zero K-rows)
            pl.BlockSpec((1, VPAD), lambda b: (0, 0)),         # vocab bias (padded)
        ],
        out_specs=pl.BlockSpec((1, T, VPAD), lambda b: (b, 0, 0)),
        compiler_params=pltpu.CompilerParams(
            # one batch element per grid step -> v7x megacore splits the batch;
            # VMEM use is << 1 MiB so no vmem_limit_bytes needed at these sizes.
            dimension_semantics=("parallel",),
        ),
    )(tgt3, patches,
      kp["emb"], kp["wconv"], kp["bconv"], kp["wq"], kp["bq"],
      kp["wkv"], kp["bkv"], kp["wout"], kp["bout"])


# ------------------------------- glue --------------------------------------
def im2col_nchw(x, kh=KH, kw=KW):
    """x: [B, C, H, W] (NCHW, pad=1) -> patches [B, H*W, C*kh*kw].
    Column order matches PyTorch weight.reshape(C_out, C_in*kh*kw): C-major,
    then (dy, dx) row-major."""
    b, c, h, w = x.shape
    xp = jnp.pad(x, ((0, 0), (0, 0), (1, 1), (1, 1)))
    cols = [xp[:, :, dy:dy + h, dx:dx + w] for dy in range(kh) for dx in range(kw)]
    patches = jnp.stack(cols, axis=2)                       # [B, C, kh*kw, H, W]
    patches = patches.transpose(0, 3, 4, 1, 2)              # [B, H, W, C, kh*kw]
    return patches.reshape(b, h * w, c * kh * kw)           # [B, H*W, C*kh*kw]


def init_params(key):
    ks = jax.random.split(key, 8)
    p = {}
    # encoder conv: PyTorch layout [C_out, C_in, kh, kw]
    p["conv_w"] = jax.random.normal(ks[0], (D, C_IN, KH, KW), jnp.float32) * 0.1
    p["conv_b"] = jax.random.normal(ks[1], (D,), jnp.float32) * 0.01
    # decoder
    p["emb"] = jax.random.normal(ks[2], (VOCAB, D), jnp.float32) * 0.1
    p["wq"] = jax.random.normal(ks[3], (D, D), jnp.float32) * 0.1
    p["wk"] = jax.random.normal(ks[4], (D, D), jnp.float32) * 0.1
    p["wv"] = jax.random.normal(ks[5], (D, D), jnp.float32) * 0.1
    p["bq"] = jnp.zeros((D,), jnp.float32)
    p["bk"] = jnp.zeros((D,), jnp.float32)
    p["bv"] = jnp.zeros((D,), jnp.float32)
    p["w_out"] = jax.random.normal(ks[6], (D, VOCAB), jnp.float32) * 0.1
    p["b_out"] = jax.random.normal(ks[7], (VOCAB,), jnp.float32) * 0.01
    return p


def prepare_params(raw):
    """Hoisted (one-time) reshape / concat / pad / scale-fold / cast into kernel layout."""
    kp = {}
    # conv as matmul: [C_out, C_in*kh*kw]^T, K padded 36 -> 64 with zeros
    wconv = raw["conv_w"].reshape(D, KRAW).T                             # [36, 32]
    kp["wconv"] = jnp.zeros((KPAD, D), jnp.float32).at[:KRAW].set(wconv).astype(jnp.bfloat16)
    kp["bconv"] = raw["conv_b"].reshape(1, D).astype(jnp.float32)
    # Q projection padded to 2D output lanes; upper half exactly zero.
    # Attention scale 1/sqrt(D) folded in here (removes an in-kernel [T,S] multiply).
    kp["wq"] = (jnp.zeros((D, D2), jnp.float32)
                .at[:, :D].set(raw["wq"] * SCALE).astype(jnp.bfloat16))
    kp["bq"] = jnp.zeros((1, D2), jnp.float32).at[0, :D].set(raw["bq"] * SCALE)
    # merged K|V projection
    kp["wkv"] = jnp.concatenate([raw["wk"], raw["wv"]], axis=1).astype(jnp.bfloat16)  # [D, 2D]
    kp["bkv"] = jnp.concatenate([raw["bk"], raw["bv"]]).reshape(1, D2).astype(jnp.float32)
    # vocab head: zero rows for the K-half of ctx, VOCAB padded to 128 lanes
    kp["wout"] = (jnp.zeros((D2, VPAD), jnp.float32)
                  .at[D:, :VOCAB].set(raw["w_out"]).astype(jnp.bfloat16))
    kp["bout"] = jnp.zeros((1, VPAD), jnp.float32).at[0, :VOCAB].set(raw["b_out"])
    # token embedding table (looked up inside the kernel via one-hot matmul)
    kp["emb"] = raw["emb"].astype(jnp.bfloat16)
    return kp


@jax.jit
def encoder_decoder_forward(kp, image, tgt):
    """image: [B, C_IN, H, W] NCHW, tgt: [B, T] int32 -> preds [B, T, VOCAB]."""
    patches = im2col_nchw(image)                                         # [B, S, 36]
    patches = jnp.pad(patches, ((0, 0), (0, 0), (0, KPAD - KRAW))).astype(jnp.bfloat16)
    tgt3 = tgt.astype(jnp.int32)[:, :, None]                             # [B, T, 1]
    logits_pad = fused_forward(tgt3, patches, kp)                        # [B, T, VPAD]
    return logits_pad[:, :, :VOCAB]


# ----------------------- pure-JAX f32 reference -----------------------------
def reference_forward(raw, image, tgt):
    patches = im2col_nchw(image)                                         # [B, S, 36]
    wmat = raw["conv_w"].reshape(D, KRAW).T
    feat = jnp.maximum(jnp.einsum("bsk,kd->bsd", patches, wmat) + raw["conv_b"], 0.0)
    temb = raw["emb"][tgt]
    q = jnp.einsum("btd,de->bte", temb, raw["wq"]) + raw["bq"]
    k = jnp.einsum("bsd,de->bse", feat, raw["wk"]) + raw["bk"]
    v = jnp.einsum("bsd,de->bse", feat, raw["wv"]) + raw["bv"]
    scores = jnp.einsum("btd,bsd->bts", q, k) * SCALE
    attn = jax.nn.softmax(scores, axis=-1)
    ctx = jnp.einsum("bts,bsd->btd", attn, v)
    return jnp.einsum("btd,dv->btv", ctx, raw["w_out"]) + raw["b_out"]


# ------------------------------- main ---------------------------------------
if __name__ == "__main__":
    key = jax.random.PRNGKey(0)
    k_params, k_img, k_tgt = jax.random.split(key, 3)
    raw = init_params(k_params)
    kp = prepare_params(raw)

    image = jax.random.normal(k_img, (B, C_IN, H, W), jnp.float32)       # NCHW
    tgt = jax.random.randint(k_tgt, (B, T), 0, VOCAB, dtype=jnp.int32)   # token ids

    preds = encoder_decoder_forward(kp, image, tgt)
    preds = jax.block_until_ready(preds)
    assert preds.shape == (B, T, VOCAB), preds.shape
    assert bool(jnp.all(jnp.isfinite(preds)))

    # loose tolerance: kernel uses bf16 MXU operands + approx reciprocal
    ref = reference_forward(raw, image, tgt)
    assert bool(jnp.allclose(preds, ref, atol=5e-2, rtol=5e-2)), \
        float(jnp.max(jnp.abs(preds - ref)))

    print("KERNEL_OK")
</pallas_src>

<mosaic_0001>
module attributes {stable_mosaic.version = 11 : i64} {
  func.func @_fused_kernel(%arg0: i32, %arg1: memref<1x8x1xi32, #tpu.memory_space<vmem>>, %arg2: memref<1x256x64xbf16, #tpu.memory_space<vmem>>, %arg3: memref<64x32xbf16, #tpu.memory_space<vmem>>, %arg4: memref<64x32xbf16, #tpu.memory_space<vmem>>, %arg5: memref<1x32xf32, #tpu.memory_space<vmem>>, %arg6: memref<32x64xbf16, #tpu.memory_space<vmem>>, %arg7: memref<1x64xf32, #tpu.memory_space<vmem>>, %arg8: memref<32x64xbf16, #tpu.memory_space<vmem>>, %arg9: memref<1x64xf32, #tpu.memory_space<vmem>>, %arg10: memref<64x128xbf16, #tpu.memory_space<vmem>>, %arg11: memref<1x128xf32, #tpu.memory_space<vmem>>, %arg12: memref<1x8x128xf32, #tpu.memory_space<vmem>>) attributes {dimension_semantics = [#tpu.dimension_semantics<parallel>], iteration_bounds = array<i64: 2>, scalar_prefetch = 0 : i64, scratch_operands = 0 : i64, tpu.core_type = #tpu.core_type<tc>, window_params = [{transform_indices = @transform_0, window_bounds = array<i64: 1, 8, 1>}, {transform_indices = @transform_1, window_bounds = array<i64: 1, 256, 64>}, {pipeline_mode = #tpu.pipeline_mode<synchronous>, transform_indices = @transform_2, window_bounds = array<i64: 64, 32>}, {pipeline_mode = #tpu.pipeline_mode<synchronous>, transform_indices = @transform_3, window_bounds = array<i64: 64, 32>}, {pipeline_mode = #tpu.pipeline_mode<synchronous>, transform_indices = @transform_4, window_bounds = array<i64: 1, 32>}, {pipeline_mode = #tpu.pipeline_mode<synchronous>, transform_indices = @transform_5, window_bounds = array<i64: 32, 64>}, {pipeline_mode = #tpu.pipeline_mode<synchronous>, transform_indices = @transform_6, window_bounds = array<i64: 1, 64>}, {pipeline_mode = #tpu.pipeline_mode<synchronous>, transform_indices = @transform_7, window_bounds = array<i64: 32, 64>}, {pipeline_mode = #tpu.pipeline_mode<synchronous>, transform_indices = @transform_8, window_bounds = array<i64: 1, 64>}, {pipeline_mode = #tpu.pipeline_mode<synchronous>, transform_indices = @transform_9, window_bounds = array<i64: 64, 128>}, {pipeline_mode = #tpu.pipeline_mode<synchronous>, transform_indices = @transform_10, window_bounds = array<i64: 1, 128>}, {transform_indices = @transform_11, window_bounds = array<i64: 1, 8, 128>}]} {
    %c0 = arith.constant 0 : index
    %c0_0 = arith.constant 0 : index
    %c0_1 = arith.constant 0 : index
    %0 = vector.load %arg2[%c0, %c0_0, %c0_1] : memref<1x256x64xbf16, #tpu.memory_space<vmem>>, vector<1x256x64xbf16>
    %1 = vector.shape_cast %0 : vector<1x256x64xbf16> to vector<256x64xbf16>
    %c0_2 = arith.constant 0 : index
    %c0_3 = arith.constant 0 : index
    %c0_4 = arith.constant 0 : index
    %2 = vector.load %arg1[%c0_2, %c0_3, %c0_4] : memref<1x8x1xi32, #tpu.memory_space<vmem>>, vector<1x8x1xi32>
    %3 = vector.shape_cast %2 : vector<1x8x1xi32> to vector<8x1xi32>
    %c0_5 = arith.constant 0 : index
    %c0_6 = arith.constant 0 : index
    %4 = vector.load %arg4[%c0_5, %c0_6] : memref<64x32xbf16, #tpu.memory_space<vmem>>, vector<64x32xbf16>
    %cst = arith.constant dense<0.000000e+00> : vector<256x32xf32>
    %5 = tpu.matmul %1, %4, %cst {dimension_numbers = #tpu.dot_dimension_numbers<[1], [0], [0], [1], [0, 0, 1, 1], [], []>} : vector<256x64xbf16>, vector<64x32xbf16>, vector<256x32xf32> -> vector<256x32xf32>
    %c0_7 = arith.constant 0 : index
    %c0_8 = arith.constant 0 : index
    %6 = vector.load %arg5[%c0_7, %c0_8] : memref<1x32xf32, #tpu.memory_space<vmem>>, vector<1x32xf32>
    %7 = vector.broadcast %6 : vector<1x32xf32> to vector<256x32xf32>
    %8 = arith.addf %5, %7 : vector<256x32xf32>
    %cst_9 = arith.constant 0.000000e+00 : f32
    %9 = vector.broadcast %cst_9 : f32 to vector<256x32xf32>
    %10 = arith.maximumf %8, %9 : vector<256x32xf32>
    %11 = tpu.iota {dimensions = array<i32: 1>} : vector<8x64xi32>
    %12 = vector.broadcast %3 : vector<8x1xi32> to vector<8x64xi32>
    %13 = arith.cmpi eq, %12, %11 : vector<8x64xi32>
    %14 = arith.extui %13 : vector<8x64xi1> to vector<8x64xi32>
    %15 = arith.sitofp %14 : vector<8x64xi32> to vector<8x64xf32>
    %16 = arith.truncf %15 : vector<8x64xf32> to vector<8x64xbf16>
    %c0_10 = arith.constant 0 : index
    %c0_11 = arith.constant 0 : index
    %17 = vector.load %arg3[%c0_10, %c0_11] : memref<64x32xbf16, #tpu.memory_space<vmem>>, vector<64x32xbf16>
    %cst_12 = arith.constant dense<0.000000e+00> : vector<8x32xf32>
    %18 = tpu.matmul %16, %17, %cst_12 {dimension_numbers = #tpu.dot_dimension_numbers<[1], [0], [0], [1], [0, 0, 1, 1], [], []>} : vector<8x64xbf16>, vector<64x32xbf16>, vector<8x32xf32> -> vector<8x32xf32>
    %19 = arith.truncf %10 : vector<256x32xf32> to vector<256x32xbf16>
    %c0_13 = arith.constant 0 : index
    %c0_14 = arith.constant 0 : index
    %20 = vector.load %arg8[%c0_13, %c0_14] : memref<32x64xbf16, #tpu.memory_space<vmem>>, vector<32x64xbf16>
    %cst_15 = arith.constant dense<0.000000e+00> : vector<256x64xf32>
    %21 = tpu.matmul %19, %20, %cst_15 {dimension_numbers = #tpu.dot_dimension_numbers<[1], [0], [0], [1], [0, 0, 1, 1], [], []>} : vector<256x32xbf16>, vector<32x64xbf16>, vector<256x64xf32> -> vector<256x64xf32>
    %c0_16 = arith.constant 0 : index
    %c0_17 = arith.constant 0 : index
    %22 = vector.load %arg9[%c0_16, %c0_17] : memref<1x64xf32, #tpu.memory_space<vmem>>, vector<1x64xf32>
    %23 = vector.broadcast %22 : vector<1x64xf32> to vector<256x64xf32>
    %24 = arith.addf %21, %23 : vector<256x64xf32>
    %25 = arith.truncf %24 : vector<256x64xf32> to vector<256x64xbf16>
    %26 = arith.truncf %18 : vector<8x32xf32> to vector<8x32xbf16>
    %c0_18 = arith.constant 0 : index
    %c0_19 = arith.constant 0 : index
    %27 = vector.load %arg6[%c0_18, %c0_19] : memref<32x64xbf16, #tpu.memory_space<vmem>>, vector<32x64xbf16>
    %cst_20 = arith.constant dense<0.000000e+00> : vector<8x64xf32>
    %28 = tpu.matmul %26, %27, %cst_20 {dimension_numbers = #tpu.dot_dimension_numbers<[1], [0], [0], [1], [0, 0, 1, 1], [], []>} : vector<8x32xbf16>, vector<32x64xbf16>, vector<8x64xf32> -> vector<8x64xf32>
    %c0_21 = arith.constant 0 : index
    %c0_22 = arith.constant 0 : index
    %29 = vector.load %arg7[%c0_21, %c0_22] : memref<1x64xf32, #tpu.memory_space<vmem>>, vector<1x64xf32>
    %30 = vector.broadcast %29 : vector<1x64xf32> to vector<8x64xf32>
    %31 = arith.addf %28, %30 : vector<8x64xf32>
    %32 = arith.truncf %31 : vector<8x64xf32> to vector<8x64xbf16>
    %cst_23 = arith.constant dense<0.000000e+00> : vector<8x256xf32>
    %33 = tpu.matmul %32, %25, %cst_23 {dimension_numbers = #tpu.dot_dimension_numbers<[1], [1], [0], [0], [0, 0, 1, 0], [], []>} : vector<8x64xbf16>, vector<256x64xbf16>, vector<8x256xf32> -> vector<8x256xf32>
    %cst_24 = arith.constant dense<0xFF800000> : vector<8xf32>
    %34 = vector.multi_reduction <maximumf>, %33, %cst_24 [1] : vector<8x256xf32> to vector<8xf32>
    %35 = vector.shape_cast %34 : vector<8xf32> to vector<8x1xf32>
    %36 = vector.broadcast %35 : vector<8x1xf32> to vector<8x256xf32>
    %37 = arith.subf %33, %36 : vector<8x256xf32>
    %38 = math.exp %37 : vector<8x256xf32>
    %cst_25 = arith.constant dense<0.000000e+00> : vector<8xf32>
    %39 = vector.multi_reduction <add>, %38, %cst_25 [1] : vector<8x256xf32> to vector<8xf32>
    %40 = vector.shape_cast %39 : vector<8xf32> to vector<8x1xf32>
    %41 = tpu.reciprocal %40 {approx = true} : vector<8x1xf32> -> vector<8x1xf32>
    %42 = vector.broadcast %41 : vector<8x1xf32> to vector<8x256xf32>
    %43 = arith.mulf %38, %42 : vector<8x256xf32>
    %44 = arith.truncf %43 : vector<8x256xf32> to vector<8x256xbf16>
    %cst_26 = arith.constant dense<0.000000e+00> : vector<8x64xf32>
    %45 = tpu.matmul %44, %25, %cst_26 {dimension_numbers = #tpu.dot_dimension_numbers<[1], [0], [0], [1], [0, 0, 1, 1], [], []>} : vector<8x256xbf16>, vector<256x64xbf16>, vector<8x64xf32> -> vector<8x64xf32>
    %46 = arith.truncf %45 : vector<8x64xf32> to vector<8x64xbf16>
    %c0_27 = arith.constant 0 : index
    %c0_28 = arith.constant 0 : index
    %47 = vector.load %arg10[%c0_27, %c0_28] : memref<64x128xbf16, #tpu.memory_space<vmem>>, vector<64x128xbf16>
    %cst_29 = arith.constant dense<0.000000e+00> : vector<8x128xf32>
    %48 = tpu.matmul %46, %47, %cst_29 {dimension_numbers = #tpu.dot_dimension_numbers<[1], [0], [0], [1], [0, 0, 1, 1], [], []>} : vector<8x64xbf16>, vector<64x128xbf16>, vector<8x128xf32> -> vector<8x128xf32>
    %c0_30 = arith.constant 0 : index
    %c0_31 = arith.constant 0 : index
    %49 = vector.load %arg11[%c0_30, %c0_31] : memref<1x128xf32, #tpu.memory_space<vmem>>, vector<1x128xf32>
    %50 = vector.broadcast %49 : vector<1x128xf32> to vector<8x128xf32>
    %51 = arith.addf %48, %50 : vector<8x128xf32>
    %c0_32 = arith.constant 0 : index
    %c0_33 = arith.constant 0 : index
    %c0_34 = arith.constant 0 : index
    %52 = vector.load %arg12[%c0_32, %c0_33, %c0_34] : memref<1x8x128xf32, #tpu.memory_space<vmem>>, vector<1x8x128xf32>
    %53 = vector.shape_cast %52 : vector<1x8x128xf32> to vector<8x128xf32>
    %54 = vector.shape_cast %51 : vector<8x128xf32> to vector<1x8x128xf32>
    tpu.vector_store %arg12[%c0_32, %c0_33, %c0_34], %54 {strides = array<i32>} : memref<1x8x128xf32, #tpu.memory_space<vmem>>, vector<1x8x128xf32>,
    return
  }
  func.func @transform_0(%arg0: i32) -> (i32, i32, i32) {
    %c0_i32 = arith.constant 0 : i32
    %c0_i32_0 = arith.constant 0 : i32
    %c0_i32_1 = arith.constant 0 : i32
    return %arg0, %c0_i32, %c0_i32_0 : i32, i32, i32
  }
  func.func @transform_1(%arg0: i32) -> (i32, i32, i32) {
    %c0_i32 = arith.constant 0 : i32
    %c0_i32_0 = arith.constant 0 : i32
    %c0_i32_1 = arith.constant 0 : i32
    return %arg0, %c0_i32, %c0_i32_0 : i32, i32, i32
  }
  func.func @transform_2(%arg0: i32) -> (i32, i32) {
    %c0_i32 = arith.constant 0 : i32
    %c0_i32_0 = arith.constant 0 : i32
    %c0_i32_1 = arith.constant 0 : i32
    return %c0_i32, %c0_i32_0 : i32, i32
  }
  func.func @transform_3(%arg0: i32) -> (i32, i32) {
    %c0_i32 = arith.constant 0 : i32
    %c0_i32_0 = arith.constant 0 : i32
    %c0_i32_1 = arith.constant 0 : i32
    return %c0_i32, %c0_i32_0 : i32, i32
  }
  func.func @transform_4(%arg0: i32) -> (i32, i32) {
    %c0_i32 = arith.constant 0 : i32
    %c0_i32_0 = arith.constant 0 : i32
    %c0_i32_1 = arith.constant 0 : i32
    return %c0_i32, %c0_i32_0 : i32, i32
  }
  func.func @transform_5(%arg0: i32) -> (i32, i32) {
    %c0_i32 = arith.constant 0 : i32
    %c0_i32_0 = arith.constant 0 : i32
    %c0_i32_1 = arith.constant 0 : i32
    return %c0_i32, %c0_i32_0 : i32, i32
  }
  func.func @transform_6(%arg0: i32) -> (i32, i32) {
    %c0_i32 = arith.constant 0 : i32
    %c0_i32_0 = arith.constant 0 : i32
    %c0_i32_1 = arith.constant 0 : i32
    return %c0_i32, %c0_i32_0 : i32, i32
  }
  func.func @transform_7(%arg0: i32) -> (i32, i32) {
    %c0_i32 = arith.constant 0 : i32
    %c0_i32_0 = arith.constant 0 : i32
    %c0_i32_1 = arith.constant 0 : i32
    return %c0_i32, %c0_i32_0 : i32, i32
  }
  func.func @transform_8(%arg0: i32) -> (i32, i32) {
    %c0_i32 = arith.constant 0 : i32
    %c0_i32_0 = arith.constant 0 : i32
    %c0_i32_1 = arith.constant 0 : i32
    return %c0_i32, %c0_i32_0 : i32, i32
  }
  func.func @transform_9(%arg0: i32) -> (i32, i32) {
    %c0_i32 = arith.constant 0 : i32
    %c0_i32_0 = arith.constant 0 : i32
    %c0_i32_1 = arith.constant 0 : i32
    return %c0_i32, %c0_i32_0 : i32, i32
  }
  func.func @transform_10(%arg0: i32) -> (i32, i32) {
    %c0_i32 = arith.constant 0 : i32
    %c0_i32_0 = arith.constant 0 : i32
    %c0_i32_1 = arith.constant 0 : i32
    return %c0_i32, %c0_i32_0 : i32, i32
  }
  func.func @transform_11(%arg0: i32) -> (i32, i32, i32) {
    %c0_i32 = arith.constant 0 : i32
    %c0_i32_0 = arith.constant 0 : i32
    %c0_i32_1 = arith.constant 0 : i32
    return %arg0, %c0_i32, %c0_i32_0 : i32, i32, i32
  }
}

</mosaic_0001>

<llo_original>
// kernel: encoder_decoder_forward.1
$region0: #{encoder_decoder_forward.1}
  #allocation0 [shape = 'u32[]', space=smem, size = 0x4, offset = 0x4, fixed_abs, tag = 'smem constant byte address 0x4 - core index']
  #allocation1 [shape = 'u32[144,128]{1,0:T(1,128)}', space=vmem, size = 0x12000, scoped, tag = 'internal scratch']
  %s0 = inlined_call_operand.vmem [shape: s32[2,8,1], index: 0, kind: input, shape index: {}]
  %s1 = inlined_call_operand.vmem [shape: bf16[2,256,64], index: 1, kind: input, shape index: {}]
  %s2 = inlined_call_operand.vmem [shape: bf16[64,32], index: 2, kind: input, shape index: {}]
  %s3 = inlined_call_operand.vmem [shape: bf16[64,32], index: 3, kind: input, shape index: {}]
  %s4 = inlined_call_operand.vmem [shape: f32[1,32], index: 4, kind: input, shape index: {}]
  %s5 = inlined_call_operand.vmem [shape: bf16[32,64], index: 5, kind: input, shape index: {}]
  %s6 = inlined_call_operand.vmem [shape: f32[1,64], index: 6, kind: input, shape index: {}]
  %s7 = inlined_call_operand.vmem [shape: bf16[32,64], index: 7, kind: input, shape index: {}]
  %s8 = inlined_call_operand.vmem [shape: f32[1,64], index: 8, kind: input, shape index: {}]
  %s9 = inlined_call_operand.vmem [shape: bf16[64,128], index: 9, kind: input, shape index: {}]
  %s10 = inlined_call_operand.vmem [shape: f32[1,128], index: 10, kind: input, shape index: {}]
  %s11 = inlined_call_operand.hbm [shape: f32[2,8,128], index: 11, kind: output, shape index: {}]
  %s12 = sld [smem:[#allocation0]]
  $region77: #{encoder_decoder_forward.1} parent=0
    _
  %s14 = ssub.s32 1, %s12
  %s15 = scalar_select 0, %s14, %s12
  $region1: #{encoder_decoder_forward.1} parent=0
    #allocation2 [shape = 'u8[8192]{0}', space=vmem, size = 0x2000, scoped, tag = 'output window, operand 0']
    #allocation3 [shape = 's32[2]{0}', space=sflag, size = 0x8, scoped, tag = 'scoped memory for encoder_decoder_forward.1']
    %16 = vsyncpa [#allocation3], 0
    %s17 = scalar_lea.sflag [#allocation3], 1
    %18 = vsyncpa %s17, 0
    loop: start=0, step=1, limit=4
    $region2: #{encoder_decoder_forward.1} parent=1 // loop_pre_header
      _
    $region3: #{encoder_decoder_forward.1} parent=1 // loop_header
      %s20 = sphi 0, %s24
      %p21 = scmp.ge.s32.totalorder %s20, 4
      %s30 = sphi 0, %s32
      %s33 = sphi 0, %s30
      %s34 = sphi 0, %s33
      %s50 = sphi 0, %s34
      %s56 = sphi 0, %s58
      %s59 = sphi 0, %s56
      %s60 = sphi 0, %s59
      %s76 = sphi 0, %s60
      %s80 = sphi 0, %s80
      %s82 = sphi 0, %s80
      %s83 = sphi 0, %s82
      %s97 = sphi 0, %s83
      %s101 = sphi 0, %s101
      %s103 = sphi 0, %s101
      %s104 = sphi 0, %s103
      %s118 = sphi 0, %s104
      %s122 = sphi 0, %s122
      %s124 = sphi 0, %s122
      %s125 = sphi 0, %s124
      %s139 = sphi 0, %s125
      %s143 = sphi 0, %s143
      %s145 = sphi 0, %s143
      %s146 = sphi 0, %s145
      %s160 = sphi 0, %s146
      %s164 = sphi 0, %s164
      %s166 = sphi 0, %s164
      %s167 = sphi 0, %s166
      %s181 = sphi 0, %s167
      %s185 = sphi 0, %s185
      %s187 = sphi 0, %s185
      %s188 = sphi 0, %s187
      %s202 = sphi 0, %s188
      %s206 = sphi 0, %s206
      %s208 = sphi 0, %s206
      %s209 = sphi 0, %s208
      %s223 = sphi 0, %s209
      %s227 = sphi 0, %s227
      %s229 = sphi 0, %s227
      %s230 = sphi 0, %s229
      %s244 = sphi 0, %s230
      %s248 = sphi 0, %s248
      %s250 = sphi 0, %s248
      %s251 = sphi 0, %s250
      %s265 = sphi 0, %s251
      %s271 = sphi 0, %s273
      %s274 = sphi 0, %s271
      %s275 = sphi 0, %s274
      %s291 = sphi 0, %s275
    $region4: #{encoder_decoder_forward.1} parent=1 // loop_header_branch
      %23 = sbr.rel (%p21) target = $region8
    $region5: #{encoder_decoder_forward.1} parent=1 // loop_body
      %s25 = ssub.s32 %s20, 1
      %s26 = ssub.s32 %s20, 2
      %s27 = sadd.s32 %s20, 1
      %s28 = ssub.s32 %s20, %s27
      %p29 = scmp.eq.s32.totalorder %s28, 0
      %s31 = sadd.s32 %s30, 1
      %s32 = scalar_select %p29, %s30, %s31
      %p35 = pneg %p29
      %p36 = scmp.eq.s32.totalorder %s20, 1
      %p37 = por %p35, %p36
      %p38 = scmp.ne.s32.totalorder %s30, %s33
      %p39 = scmp.eq.s32.totalorder %s20, 0
      %p40 = por %p38, %p39
      %p41 = scmp.ne.s32.totalorder %s30, %s33
      %p42 = scmp.eq.s32.totalorder %s25, 1
      %p43 = por %p41, %p42
      %p44 = scmp.ne.s32.totalorder %s33, %s34
      %p45 = scmp.eq.s32.totalorder %s25, 0
      %p46 = por %p44, %p45
      %p47 = scmp.ne.s32.totalorder %s33, %s34
      %p48 = scmp.eq.s32.totalorder %s26, 1
      %p49 = por %p47, %p48
      %p51 = scmp.ne.s32.totalorder %s34, %s50
      %p52 = scmp.eq.s32.totalorder %s26, 0
      %p53 = por %p51, %p52
      %s54 = ssub.s32 %s20, %s27
      %p55 = scmp.eq.s32.totalorder %s54, 0
      %s57 = sadd.s32 %s56, 1
      %s58 = scalar_select %p55, %s56, %s57
      %p61 = pneg %p55
      %p62 = scmp.eq.s32.totalorder %s20, 1
      %p63 = por %p61, %p62
      %p64 = scmp.ne.s32.totalorder %s56, %s59
      %p65 = scmp.eq.s32.totalorder %s20, 0
      %p66 = por %p64, %p65
      %p67 = scmp.ne.s32.totalorder %s56, %s59
      %p68 = scmp.eq.s32.totalorder %s25, 1
      %p69 = por %p67, %p68
      %p70 = scmp.ne.s32.totalorder %s59, %s60
      %p71 = scmp.eq.s32.totalorder %s25, 0
      %p72 = por %p70, %p71
      %p73 = scmp.ne.s32.totalorder %s59, %s60
      %p74 = scmp.eq.s32.totalorder %s26, 1
      %p75 = por %p73, %p74
      %p77 = scmp.ne.s32.totalorder %s60, %s76
      %p78 = scmp.eq.s32.totalorder %s26, 0
      %p79 = por %p77, %p78
      %s81 = sadd.s32 %s80, 1
      %p84 = scmp.eq.s32.totalorder %s20, 1
      %p85 = scmp.ne.s32.totalorder %s80, %s82
      %p86 = scmp.eq.s32.totalorder %s20, 0
      %p87 = por %p85, %p86
      %p88 = scmp.ne.s32.totalorder %s80, %s82
      %p89 = scmp.eq.s32.totalorder %s25, 1
      %p90 = por %p88, %p89
      %p91 = scmp.ne.s32.totalorder %s82, %s83
      %p92 = scmp.eq.s32.totalorder %s25, 0
      %p93 = por %p91, %p92
      %p94 = scmp.ne.s32.totalorder %s82, %s83
      %p95 = scmp.eq.s32.totalorder %s26, 1
      %p96 = por %p94, %p95
      %p98 = scmp.ne.s32.totalorder %s83, %s97
      %p99 = scmp.eq.s32.totalorder %s26, 0
      %p100 = por %p98, %p99
      %s102 = sadd.s32 %s101, 1
      %p105 = scmp.eq.s32.totalorder %s20, 1
      %p106 = scmp.ne.s32.totalorder %s101, %s103
      %p107 = scmp.eq.s32.totalorder %s20, 0
      %p108 = por %p106, %p107
      %p109 = scmp.ne.s32.totalorder %s101, %s103
      %p110 = scmp.eq.s32.totalorder %s25, 1
      %p111 = por %p109, %p110
      %p112 = scmp.ne.s32.totalorder %s103, %s104
      %p113 = scmp.eq.s32.totalorder %s25, 0
      %p114 = por %p112, %p113
      %p115 = scmp.ne.s32.totalorder %s103, %s104
      %p116 = scmp.eq.s32.totalorder %s26, 1
      %p117 = por %p115, %p116
      %p119 = scmp.ne.s32.totalorder %s104, %s118
      %p120 = scmp.eq.s32.totalorder %s26, 0
      %p121 = por %p119, %p120
      %s123 = sadd.s32 %s122, 1
      %p126 = scmp.eq.s32.totalorder %s20, 1
      %p127 = scmp.ne.s32.totalorder %s122, %s124
      %p128 = scmp.eq.s32.totalorder %s20, 0
      %p129 = por %p127, %p128
      %p130 = scmp.ne.s32.totalorder %s122, %s124
      %p131 = scmp.eq.s32.totalorder %s25, 1
      %p132 = por %p130, %p131
      %p133 = scmp.ne.s32.totalorder %s124, %s125
      %p134 = scmp.eq.s32.totalorder %s25, 0
      %p135 = por %p133, %p134
      %p136 = scmp.ne.s32.totalorder %s124, %s125
      %p137 = scmp.eq.s32.totalorder %s26, 1
      %p138 = por %p136, %p137
      %p140 = scmp.ne.s32.totalorder %s125, %s139
      %p141 = scmp.eq.s32.totalorder %s26, 0
      %p142 = por %p140, %p141
      %s144 = sadd.s32 %s143, 1
      %p147 = scmp.eq.s32.totalorder %s20, 1
      %p148 = scmp.ne.s32.totalorder %s143, %s145
      %p149 = scmp.eq.s32.totalorder %s20, 0
      %p150 = por %p148, %p149
      %p151 = scmp.ne.s32.totalorder %s143, %s145
      %p152 = scmp.eq.s32.totalorder %s25, 1
      %p153 = por %p151, %p152
      %p154 = scmp.ne.s32.totalorder %s145, %s146
      %p155 = scmp.eq.s32.totalorder %s25, 0
      %p156 = por %p154, %p155
      %p157 = scmp.ne.s32.totalorder %s145, %s146
      %p158 = scmp.eq.s32.totalorder %s26, 1
      %p159 = por %p157, %p158
      %p161 = scmp.ne.s32.totalorder %s146, %s160
      %p162 = scmp.eq.s32.totalorder %s26, 0
      %p163 = por %p161, %p162
      %s165 = sadd.s32 %s164, 1
      %p168 = scmp.eq.s32.totalorder %s20, 1
      %p169 = scmp.ne.s32.totalorder %s164, %s166
      %p170 = scmp.eq.s32.totalorder %s20, 0
      %p171 = por %p169, %p170
      %p172 = scmp.ne.s32.totalorder %s164, %s166
      %p173 = scmp.eq.s32.totalorder %s25, 1
      %p174 = por %p172, %p173
      %p175 = scmp.ne.s32.totalorder %s166, %s167
      %p176 = scmp.eq.s32.totalorder %s25, 0
      %p177 = por %p175, %p176
      %p178 = scmp.ne.s32.totalorder %s166, %s167
      %p179 = scmp.eq.s32.totalorder %s26, 1
      %p180 = por %p178, %p179
      %p182 = scmp.ne.s32.totalorder %s167, %s181
      %p183 = scmp.eq.s32.totalorder %s26, 0
      %p184 = por %p182, %p183
      %s186 = sadd.s32 %s185, 1
      %p189 = scmp.eq.s32.totalorder %s20, 1
      %p190 = scmp.ne.s32.totalorder %s185, %s187
      %p191 = scmp.eq.s32.totalorder %s20, 0
      %p192 = por %p190, %p191
      %p193 = scmp.ne.s32.totalorder %s185, %s187
      %p194 = scmp.eq.s32.totalorder %s25, 1
      %p195 = por %p193, %p194
      %p196 = scmp.ne.s32.totalorder %s187, %s188
      %p197 = scmp.eq.s32.totalorder %s25, 0
      %p198 = por %p196, %p197
      %p199 = scmp.ne.s32.totalorder %s187, %s188
      %p200 = scmp.eq.s32.totalorder %s26, 1
      %p201 = por %p199, %p200
      %p203 = scmp.ne.s32.totalorder %s188, %s202
      %p204 = scmp.eq.s32.totalorder %s26, 0
      %p205 = por %p203, %p204
      %s207 = sadd.s32 %s206, 1
      %p210 = scmp.eq.s32.totalorder %s20, 1
      %p211 = scmp.ne.s32.totalorder %s206, %s208
      %p212 = scmp.eq.s32.totalorder %s20, 0
      %p213 = por %p211, %p212
      %p214 = scmp.ne.s32.totalorder %s206, %s208
      %p215 = scmp.eq.s32.totalorder %s25, 1
      %p216 = por %p214, %p215
      %p217 = scmp.ne.s32.totalorder %s208, %s209
      %p218 = scmp.eq.s32.totalorder %s25, 0
      %p219 = por %p217, %p218
      %p220 = scmp.ne.s32.totalorder %s208, %s209
      %p221 = scmp.eq.s32.totalorder %s26, 1
      %p222 = por %p220, %p221
      %p224 = scmp.ne.s32.totalorder %s209, %s223
      %p225 = scmp.eq.s32.totalorder %s26, 0
      %p226 = por %p224, %p225
      %s228 = sadd.s32 %s227, 1
      %p231 = scmp.eq.s32.totalorder %s20, 1
      %p232 = scmp.ne.s32.totalorder %s227, %s229
      %p233 = scmp.eq.s32.totalorder %s20, 0
      %p234 = por %p232, %p233
      %p235 = scmp.ne.s32.totalorder %s227, %s229
      %p236 = scmp.eq.s32.totalorder %s25, 1
      %p237 = por %p235, %p236
      %p238 = scmp.ne.s32.totalorder %s229, %s230
      %p239 = scmp.eq.s32.totalorder %s25, 0
      %p240 = por %p238, %p239
      %p241 = scmp.ne.s32.totalorder %s229, %s230
      %p242 = scmp.eq.s32.totalorder %s26, 1
      %p243 = por %p241, %p242
      %p245 = scmp.ne.s32.totalorder %s230, %s244
      %p246 = scmp.eq.s32.totalorder %s26, 0
      %p247 = por %p245, %p246
      %s249 = sadd.s32 %s248, 1
      %p252 = scmp.eq.s32.totalorder %s20, 1
      %p253 = scmp.ne.s32.totalorder %s248, %s250
      %p254 = scmp.eq.s32.totalorder %s20, 0
      %p255 = por %p253, %p254
      %p256 = scmp.ne.s32.totalorder %s248, %s250
      %p257 = scmp.eq.s32.totalorder %s25, 1
      %p258 = por %p256, %p257
      %p259 = scmp.ne.s32.totalorder %s250, %s251
      %p260 = scmp.eq.s32.totalorder %s25, 0
      %p261 = por %p259, %p260
      %p262 = scmp.ne.s32.totalorder %s250, %s251
      %p263 = scmp.eq.s32.totalorder %s26, 1
      %p264 = por %p262, %p263
      %p266 = scmp.ne.s32.totalorder %s251, %s265
      %p267 = scmp.eq.s32.totalorder %s26, 0
      %p268 = por %p266, %p267
      %s269 = ssub.s32 %s20, %s27
      %p270 = scmp.eq.s32.totalorder %s269, 0
      %s272 = sadd.s32 %s271, 1
      %s273 = scalar_select %p270, %s271, %s272
      %p276 = pneg %p270
      %p277 = scmp.eq.s32.totalorder %s20, 1
      %p278 = por %p276, %p277
      %p279 = scmp.ne.s32.totalorder %s271, %s274
      %p280 = scmp.eq.s32.totalorder %s20, 0
      %p281 = por %p279, %p280
      %p282 = scmp.ne.s32.totalorder %s271, %s274
      %p283 = scmp.eq.s32.totalorder %s25, 1
      %p284 = por %p282, %p283
      %p285 = scmp.ne.s32.totalorder %s274, %s275
      %p286 = scmp.eq.s32.totalorder %s25, 0
      %p287 = por %p285, %p286
      %p288 = scmp.ne.s32.totalorder %s274, %s275
      %p289 = scmp.eq.s32.totalorder %s26, 1
      %p290 = por %p288, %p289
      %p292 = scmp.ne.s32.totalorder %s275, %s291
      %p293 = scmp.eq.s32.totalorder %s26, 0
      %p294 = por %p292, %p293
      %p295 = scmp.le.s32.totalorder 1, %s20
      %p296 = scmp.lt.s32.totalorder %s20, 3
      %p297 = pnand %p295, %p296
      %p298 = pneg %p297
      // Predicated region
      $region9: #{encoder_decoder_forward.1} parent=5 // pred_check
        _
      $region10: #{encoder_decoder_forward.1} parent=5 // pred_check_branch
        %300 = sbr.rel (%p297) target = $region12
      $region11: #{encoder_decoder_forward.1} parent=5 // pred_region
        %s301 = ssub.s32 %s20, 1
        // Predicated region
        $region13: #{encoder_decoder_forward.1} parent=11 // pred_check
          %p302 = pneg %p93
        $region14: #{encoder_decoder_forward.1} parent=11 // pred_check_branch
          %304 = sbr.rel (%p302) target = $region16
        $region15: #{encoder_decoder_forward.1} parent=11 // pred_region
          _
        $region16: #{encoder_decoder_forward.1} parent=11 // pred_fallthru
          _
        // Predicated region
        $region17: #{encoder_decoder_forward.1} parent=11 // pred_check
          %p305 = pneg %p114
        $region18: #{encoder_decoder_forward.1} parent=11 // pred_check_branch
          %307 = sbr.rel (%p305) target = $region20
        $region19: #{encoder_decoder_forward.1} parent=11 // pred_region
          _
        $region20: #{encoder_decoder_forward.1} parent=11 // pred_fallthru
          _
        // Predicated region
        $region21: #{encoder_decoder_forward.1} parent=11 // pred_check
          %p308 = pneg %p135
        $region22: #{encoder_decoder_forward.1} parent=11 // pred_check_branch
          %310 = sbr.rel (%p308) target = $region24
        $region23: #{encoder_decoder_forward.1} parent=11 // pred_region
          _
        $region24: #{encoder_decoder_forward.1} parent=11 // pred_fallthru
          _
        // Predicated region
        $region25: #{encoder_decoder_forward.1} parent=11 // pred_check
          %p311 = pneg %p156
        $region26: #{encoder_decoder_forward.1} parent=11 // pred_check_branch
          %313 = sbr.rel (%p311) target = $region28
        $region27: #{encoder_decoder_forward.1} parent=11 // pred_region
          _
        $region28: #{encoder_decoder_forward.1} parent=11 // pred_fallthru
          _
        // Predicated region
        $region29: #{encoder_decoder_forward.1} parent=11 // pred_check
          %p314 = pneg %p177
        $region30: #{encoder_decoder_forward.1} parent=11 // pred_check_branch
          %316 = sbr.rel (%p314) target = $region32
        $region31: #{encoder_decoder_forward.1} parent=11 // pred_region
          _
        $region32: #{encoder_decoder_forward.1} parent=11 // pred_fallthru
          _
        // Predicated region
        $region33: #{encoder_decoder_forward.1} parent=11 // pred_check
          %p317 = pneg %p198
        $region34: #{encoder_decoder_forward.1} parent=11 // pred_check_branch
          %319 = sbr.rel (%p317) target = $region36
        $region35: #{encoder_decoder_forward.1} parent=11 // pred_region
          _
        $region36: #{encoder_decoder_forward.1} parent=11 // pred_fallthru
          _
        // Predicated region
        $region37: #{encoder_decoder_forward.1} parent=11 // pred_check
          %p320 = pneg %p219
        $region38: #{encoder_decoder_forward.1} parent=11 // pred_check_branch
          %322 = sbr.rel (%p320) target = $region40
        $region39: #{encoder_decoder_forward.1} parent=11 // pred_region
          _
        $region40: #{encoder_decoder_forward.1} parent=11 // pred_fallthru
          _
        // Predicated region
        $region41: #{encoder_decoder_forward.1} parent=11 // pred_check
          %p323 = pneg %p240
        $region42: #{encoder_decoder_forward.1} parent=11 // pred_check_branch
          %325 = sbr.rel (%p323) target = $region44
        $region43: #{encoder_decoder_forward.1} parent=11 // pred_region
          _
        $region44: #{encoder_decoder_forward.1} parent=11 // pred_fallthru
          _
        // Predicated region
        $region45: #{encoder_decoder_forward.1} parent=11 // pred_check
          %p326 = pneg %p261
        $region46: #{encoder_decoder_forward.1} parent=11 // pred_check_branch
          %328 = sbr.rel (%p326) target = $region48
        $region47: #{encoder_decoder_forward.1} parent=11 // pred_region
          _
        $region48: #{encoder_decoder_forward.1} parent=11 // pred_fallthru
          _
      $region12: #{encoder_decoder_forward.1} parent=5 // pred_fallthru
        _
      %p329 = scmp.lt.s32.totalorder %s20, 2
      // Predicated region
      $region49: #{encoder_decoder_forward.1} parent=5 // pred_check
        %p330 = pneg %p329
      $region50: #{encoder_decoder_forward.1} parent=5 // pred_check_branch
        %332 = sbr.rel (%p330) target = $region52
      $region51: #{encoder_decoder_forward.1} parent=5 // pred_region
        // Predicated region
        $region53: #{encoder_decoder_forward.1} parent=51 // pred_check
          %p333 = pneg %p40
        $region54: #{encoder_decoder_forward.1} parent=51 // pred_check_branch
          %335 = sbr.rel (%p333) target = $region56
        $region55: #{encoder_decoder_forward.1} parent=51 // pred_region
          %p336 = scmp.lt.s32.totalorder %s20, 1
          %s337 = scalar_select %p336, %s20, 1
          %s338 = smul.addr %s337, 8
          %s339 = scalar_lea.vmem %s0, %s338
        $region56: #{encoder_decoder_forward.1} parent=51 // pred_fallthru
          _
        // Predicated region
        $region57: #{encoder_decoder_forward.1} parent=51 // pred_check
          %p340 = pneg %p66
        $region58: #{encoder_decoder_forward.1} parent=51 // pred_check_branch
          %342 = sbr.rel (%p340) target = $region60
        $region59: #{encoder_decoder_forward.1} parent=51 // pred_region
          %p343 = scmp.lt.s32.totalorder %s20, 1
          %s344 = scalar_select %p343, %s20, 1
          %s345 = smul.addr %s344, 32
          %s346 = smul.addr %s345, 4
          %s347 = scalar_lea.vmem %s1, %s346
        $region60: #{encoder_decoder_forward.1} parent=51 // pred_fallthru
          _
      $region52: #{encoder_decoder_forward.1} parent=5 // pred_fallthru
        _
      %p348 = scmp.le.s32.totalorder 1, %s20
      %p349 = scmp.lt.s32.totalorder %s20, 3
      %p350 = pnand %p348, %p349
      %p351 = pneg %p350
      // Predicated region
      $region61: #{encoder_decoder_forward.1} parent=5 // pred_check
        _
      $region62: #{encoder_decoder_forward.1} parent=5 // pred_check_branch
        %353 = sbr.rel (%p350) target = $region64
      $region63: #{encoder_decoder_forward.1} parent=5 // pred_region
        %s354 = ssub.s32 %s20, 1
        %p355 = scmp.lt.s32.totalorder %s25, 1
        %s356 = scalar_select %p355, %s25, 1
        %s357 = smul.addr %s356, 8
        %s358 = scalar_lea.vmem %s0, %s357
        %p359 = pneg %p46
        %p360 = pneg %p43
        %p361 = scmp.lt.s32.totalorder %s25, 1
        %s362 = scalar_select %p361, %s25, 1
        %s363 = smul.addr %s362, 32
        %s364 = smul.addr %s363, 4
        %s365 = scalar_lea.vmem %s1, %s364
        %p366 = pneg %p72
        %p367 = pneg %p69
        %p368 = pneg %p93
        %p369 = pneg %p90
        %p370 = pneg %p114
        %p371 = pneg %p111
        %p372 = pneg %p135
        %p373 = pneg %p132
        %p374 = pneg %p156
        %p375 = pneg %p153
        %p376 = pneg %p177
        %p377 = pneg %p174
        %p378 = pneg %p198
        %p379 = pneg %p195
        %p380 = pneg %p219
        %p381 = pneg %p216
        %p382 = pneg %p240
        %p383 = pneg %p237
        %p384 = pneg %p261
        %p385 = pneg %p258
        %p386 = pneg %p287
        %p387 = pneg %p284
        %s388 = sand.u32 %s274, 1
        %s389 = scalar_lea.sflag [#allocation3], %s388
        %s390 = sand.u32 %s274, 1
        %s391 = smul.addr %s390, 8
        %s392 = scalar_lea.vmem [#allocation2], %s391
        %p393 = scmp.lt.s32.totalorder %s25, 1
        %s394 = scalar_select %p393, %s25, 1
        %s395 = smul.addr %s394, 8
        %s396 = scalar_lea.vmem %s0, %s395
        %p397 = scmp.lt.s32.totalorder %s25, 1
        %s398 = scalar_select %p397, %s25, 1
        %s399 = smul.addr %s398, 32
        %s400 = smul.addr %s399, 4
        %s401 = scalar_lea.vmem %s1, %s400
        %v403 = vld [vmem:[%s401] sm:$0xf]
        %v404 = vld [vmem:[%s401 + $0x4] sm:$0xf]
        %v405 = vld [vmem:[%s401 + $0x8] sm:$0xf]
        %v406 = vld [vmem:[%s401 + $0xc] sm:$0xf]
        %v407 = vld [vmem:[%s401 + $0x10] sm:$0xf]
        %v408 = vld [vmem:[%s401 + $0x14] sm:$0xf]
        %v409 = vld [vmem:[%s401 + $0x18] sm:$0xf]
        %v410 = vld [vmem:[%s401 + $0x1c] sm:$0xf]
        %v411 = vld [vmem:[%s401 + $0x20] sm:$0xf]
        %v412 = vld [vmem:[%s401 + $0x24] sm:$0xf]
        %v413 = vld [vmem:[%s401 + $0x28] sm:$0xf]
        %v414 = vld [vmem:[%s401 + $0x2c] sm:$0xf]
        %v415 = vld [vmem:[%s401 + $0x30] sm:$0xf]
        %v416 = vld [vmem:[%s401 + $0x34] sm:$0xf]
        %v417 = vld [vmem:[%s401 + $0x38] sm:$0xf]
        %v418 = vld [vmem:[%s401 + $0x3c] sm:$0xf]
        %v419 = vld [vmem:[%s401 + $0x40] sm:$0xf]
        %v420 = vld [vmem:[%s401 + $0x44] sm:$0xf]
        %v421 = vld [vmem:[%s401 + $0x48] sm:$0xf]
        %v422 = vld [vmem:[%s401 + $0x4c] sm:$0xf]
        %v423 = vld [vmem:[%s401 + $0x50] sm:$0xf]
        %v424 = vld [vmem:[%s401 + $0x54] sm:$0xf]
        %v425 = vld [vmem:[%s401 + $0x58] sm:$0xf]
        %v426 = vld [vmem:[%s401 + $0x5c] sm:$0xf]
        %v427 = vld [vmem:[%s401 + $0x60] sm:$0xf]
        %v428 = vld [vmem:[%s401 + $0x64] sm:$0xf]
        %v429 = vld [vmem:[%s401 + $0x68] sm:$0xf]
        %v430 = vld [vmem:[%s401 + $0x6c] sm:$0xf]
        %v431 = vld [vmem:[%s401 + $0x70] sm:$0xf]
        %v432 = vld [vmem:[%s401 + $0x74] sm:$0xf]
        %v433 = vld [vmem:[%s401 + $0x78] sm:$0xf]
        %v434 = vld [vmem:[%s401 + $0x7c] sm:$0xf]
        %v435 = vld [vmem:[%s396] sm:$0xff]
        %v436 = vld [vmem:[%s3] sm:$0xf]
        %v437 = vld [vmem:[%s3 + $0x4] sm:$0xf]
        %v438 = vld [vmem:[%s3 + $0x8] sm:$0xf]
        %v439 = vld [vmem:[%s3 + $0xc] sm:$0xf]
        %v440 = vld [vmem:[%s3 + $0x10] sm:$0xf]
        %v441 = vld [vmem:[%s3 + $0x14] sm:$0xf]
        %v442 = vld [vmem:[%s3 + $0x18] sm:$0xf]
        %v443 = vld [vmem:[%s3 + $0x1c] sm:$0xf]
        %v444 = vld [vmem:[%s4] sm:$0x1]
        %v446 = vlaneseq
        %v447 = vshrl.u32 %v446, 7
        %v448 = vsub.s32 0, %v447
        %v449 = vrot.slane %v444, %v448
        %v483 = vunpack.c.l.b16 %v403
        %v484 = vunpack.c.l.b16 %v404
        %v485 = vunpack.c.l.b16 %v405
        %v486 = vunpack.c.l.b16 %v406
        %v487 = vunpack.c.l.b16 %v407
        %v488 = vunpack.c.l.b16 %v408
        %v489 = vunpack.c.l.b16 %v409
        %v490 = vunpack.c.l.b16 %v410
        %v491 = vunpack.c.l.b16 %v411
        %v492 = vunpack.c.l.b16 %v412
        %v493 = vunpack.c.l.b16 %v413
        %v494 = vunpack.c.l.b16 %v414
        %v495 = vunpack.c.l.b16 %v415
        %v496 = vunpack.c.l.b16 %v416
        %v497 = vunpack.c.l.b16 %v417
        %v498 = vunpack.c.l.b16 %v418
        %v499 = vunpack.c.l.b16 %v419
        %v500 = vunpack.c.l.b16 %v420
        %v501 = vunpack.c.l.b16 %v421
        %v502 = vunpack.c.l.b16 %v422
        %v503 = vunpack.c.l.b16 %v423
        %v504 = vunpack.c.l.b16 %v424
        %v505 = vunpack.c.l.b16 %v425
        %v506 = vunpack.c.l.b16 %v426
        %v507 = vunpack.c.l.b16 %v427
        %v508 = vunpack.c.l.b16 %v428
        %v509 = vunpack.c.l.b16 %v429
        %v510 = vunpack.c.l.b16 %v430
        %v511 = vunpack.c.l.b16 %v431
        %v512 = vunpack.c.l.b16 %v432
        %v513 = vunpack.c.l.b16 %v433
        %v514 = vunpack.c.l.b16 %v434
        %v515 = vpack.c.b16 %v484, %v483
        %v516 = vpack.c.b16 %v486, %v485
        %v517 = vpack.c.b16 %v488, %v487
        %v518 = vpack.c.b16 %v490, %v489
        %v519 = vpack.c.b16 %v492, %v491
        %v520 = vpack.c.b16 %v494, %v493
        %v521 = vpack.c.b16 %v496, %v495
        %v522 = vpack.c.b16 %v498, %v497
        %v523 = vpack.c.b16 %v500, %v499
        %v524 = vpack.c.b16 %v502, %v501
        %v525 = vpack.c.b16 %v504, %v503
        %v526 = vpack.c.b16 %v506, %v505
        %v527 = vpack.c.b16 %v508, %v507
        %v528 = vpack.c.b16 %v510, %v509
        %v529 = vpack.c.b16 %v512, %v511
        %v530 = vpack.c.b16 %v514, %v513
        %v539 = vunpack.c.l.b16 %v436
        %v540 = vunpack.c.l.b16 %v437
        %v541 = vunpack.c.l.b16 %v438
        %v542 = vunpack.c.l.b16 %v439
        %v543 = vunpack.c.l.b16 %v440
        %v544 = vunpack.c.l.b16 %v441
        %v545 = vunpack.c.l.b16 %v442
        %v546 = vunpack.c.l.b16 %v443
        %v547 = vpack.c.b16 %v540, %v539
        %v548 = vpack.c.b16 %v542, %v541
        %v549 = vpack.c.b16 %v544, %v543
        %v550 = vpack.c.b16 %v546, %v545
        %vm555 = vcmask 523264
        %v557 = vsel %vm555, %v515, 0
        %v560 = vsel %vm555, %v516, 0
        %v563 = vsel %vm555, %v517, 0
        %v566 = vsel %vm555, %v518, 0
        %v569 = vsel %vm555, %v519, 0
        %v572 = vsel %vm555, %v520, 0
        %v575 = vsel %vm555, %v521, 0
        %v578 = vsel %vm555, %v522, 0
        %v581 = vsel %vm555, %v523, 0
        %v584 = vsel %vm555, %v524, 0
        %v587 = vsel %vm555, %v525, 0
        %v590 = vsel %vm555, %v526, 0
        %v593 = vsel %vm555, %v527, 0
        %v596 = vsel %vm555, %v528, 0
        %v599 = vsel %vm555, %v529, 0
        %v602 = vsel %vm555, %v530, 0
        %604 = vmatprep.subr.bf16.mxu0 0
        %605 = vmatpush1.bf16.msra.mxu0 %v547
        %606 = vmatprep.subr.bf16.mxu0 0
        %607 = vmatpush1.bf16.msra.mxu0 %v548
        %608 = vmatprep.subr.bf16.mxu0 0
        %609 = vmatpush1.bf16.msra.mxu0 %v549
        %610 = vmatprep.subr.bf16.mxu0 0
        %611 = vmatpush1.bf16.msra.mxu0 %v550
        %612 = vmatprep.subr.bf16.mxu0 0
        %613 = vmatpush1.bf16.msra.mxu0 0
        %614 = vmatprep.subr.bf16.mxu0 0
        %615 = vmatpush1.bf16.msra.mxu0 0
        %616 = vmatprep.subr.bf16.mxu0 0
        %617 = vmatpush1.bf16.msra.mxu0 0
        %618 = vmatprep.subr.bf16.mxu0 0
        %619 = vmatpush1.bf16.msra.mxu0 0
        %620 = vmatprep.subr.bf16.mxu0 0
        %621 = vmatpush1.bf16.msra.mxu0 0
        %622 = vmatprep.subr.bf16.mxu0 0
        %623 = vmatpush1.bf16.msra.mxu0 0
        %624 = vmatprep.subr.bf16.mxu0 0
        %625 = vmatpush1.bf16.msra.mxu0 0
        %626 = vmatprep.subr.bf16.mxu0 0
        %627 = vmatpush1.bf16.msra.mxu0 0
        %628 = vmatprep.subr.bf16.mxu0 0
        %629 = vmatpush1.bf16.msra.mxu0 0
        %630 = vmatprep.subr.bf16.mxu0 0
        %631 = vmatpush1.bf16.msra.mxu0 0
        %632 = vmatprep.subr.bf16.mxu0 0
        %633 = vmatpush1.bf16.msra.mxu0 0
        %634 = vmatprep.subr.bf16.mxu0 0
        %635 = vmatpush1.bf16.msra.mxu0 0
        %636 = vmatprep.mubr.bf16.mxu0 0
        %637 = vmatmul.mubr.bf16.gmra.mrb[0].mxu0 %v557
        %v638 = vpop.f32.mrb[0].mxu0
        %v639 = vadd.f32 %v449, %v638
        %v640 = vpop.f32.mrb[0].mxu0
        %v641 = vpop.f32.mrb[0].mxu0
        %v642 = vadd.f32 %v449, %v641
        %v643 = vpop.f32.mrb[0].mxu0
        %644 = vmatprep.mubr.bf16.mxu0 0
        %645 = vmatmul.mubr.bf16.gmra.mrb[0].mxu0 %v560
        %v646 = vpop.f32.mrb[0].mxu0
        %v647 = vadd.f32 %v449, %v646
        %v648 = vpop.f32.mrb[0].mxu0
        %v649 = vpop.f32.mrb[0].mxu0
        %v650 = vadd.f32 %v449, %v649
        %v651 = vpop.f32.mrb[0].mxu0
        %652 = vmatprep.mubr.bf16.mxu0 0
        %653 = vmatmul.mubr.bf16.gmra.mrb[0].mxu0 %v563
        %v654 = vpop.f32.mrb[0].mxu0
        %v655 = vadd.f32 %v449, %v654
        %v656 = vpop.f32.mrb[0].mxu0
        %v657 = vpop.f32.mrb[0].mxu0
        %v658 = vadd.f32 %v449, %v657
        %v659 = vpop.f32.mrb[0].mxu0
        %660 = vmatprep.mubr.bf16.mxu0 0
        %661 = vmatmul.mubr.bf16.gmra.mrb[0].mxu0 %v566
        %v662 = vpop.f32.mrb[0].mxu0
        %v663 = vadd.f32 %v449, %v662
        %v664 = vpop.f32.mrb[0].mxu0
        %v665 = vpop.f32.mrb[0].mxu0
        %v666 = vadd.f32 %v449, %v665
        %v667 = vpop.f32.mrb[0].mxu0
        %668 = vmatprep.mubr.bf16.mxu0 0
        %669 = vmatmul.mubr.bf16.gmra.mrb[0].mxu0 %v569
        %v670 = vpop.f32.mrb[0].mxu0
        %v671 = vadd.f32 %v449, %v670
        %v672 = vpop.f32.mrb[0].mxu0
        %v673 = vpop.f32.mrb[0].mxu0
        %v674 = vadd.f32 %v449, %v673
        %v675 = vpop.f32.mrb[0].mxu0
        %676 = vmatprep.mubr.bf16.mxu0 0
        %677 = vmatmul.mubr.bf16.gmra.mrb[0].mxu0 %v572
        %v678 = vpop.f32.mrb[0].mxu0
        %v679 = vadd.f32 %v449, %v678
        %v680 = vpop.f32.mrb[0].mxu0
        %v681 = vpop.f32.mrb[0].mxu0
        %v682 = vadd.f32 %v449, %v681
        %v683 = vpop.f32.mrb[0].mxu0
        %684 = vmatprep.mubr.bf16.mxu0 0
        %685 = vmatmul.mubr.bf16.gmra.mrb[0].mxu0 %v575
        %v686 = vpop.f32.mrb[0].mxu0
        %v687 = vadd.f32 %v449, %v686
        %v688 = vpop.f32.mrb[0].mxu0
        %v689 = vpop.f32.mrb[0].mxu0
        %v690 = vadd.f32 %v449, %v689
        %v691 = vpop.f32.mrb[0].mxu0
        %692 = vmatprep.mubr.bf16.mxu0 0
        %693 = vmatmul.mubr.bf16.gmra.mrb[0].mxu0 %v578
        %v694 = vpop.f32.mrb[0].mxu0
        %v695 = vadd.f32 %v449, %v694
        %v696 = vpop.f32.mrb[0].mxu0
        %v697 = vpop.f32.mrb[0].mxu0
        %v698 = vadd.f32 %v449, %v697
        %v699 = vpop.f32.mrb[0].mxu0
        %700 = vmatprep.mubr.bf16.mxu0 0
        %701 = vmatmul.mubr.bf16.gmra.mrb[0].mxu0 %v581
        %v702 = vpop.f32.mrb[0].mxu0
        %v703 = vadd.f32 %v449, %v702
        %v704 = vpop.f32.mrb[0].mxu0
        %v705 = vpop.f32.mrb[0].mxu0
        %v706 = vadd.f32 %v449, %v705
        %v707 = vpop.f32.mrb[0].mxu0
        %708 = vmatprep.mubr.bf16.mxu0 0
        %709 = vmatmul.mubr.bf16.gmra.mrb[0].mxu0 %v584
        %v710 = vpop.f32.mrb[0].mxu0
        %v711 = vadd.f32 %v449, %v710
        %v712 = vpop.f32.mrb[0].mxu0
        %v713 = vpop.f32.mrb[0].mxu0
        %v714 = vadd.f32 %v449, %v713
        %v715 = vpop.f32.mrb[0].mxu0
        %716 = vmatprep.mubr.bf16.mxu0 0
        %717 = vmatmul.mubr.bf16.gmra.mrb[0].mxu0 %v587
        %v718 = vpop.f32.mrb[0].mxu0
        %v719 = vadd.f32 %v449, %v718
        %v720 = vpop.f32.mrb[0].mxu0
        %v721 = vpop.f32.mrb[0].mxu0
        %v722 = vadd.f32 %v449, %v721
        %v723 = vpop.f32.mrb[0].mxu0
        %724 = vmatprep.mubr.bf16.mxu0 0
        %725 = vmatmul.mubr.bf16.gmra.mrb[0].mxu0 %v590
        %v726 = vpop.f32.mrb[0].mxu0
        %v727 = vadd.f32 %v449, %v726
        %v728 = vpop.f32.mrb[0].mxu0
        %v729 = vpop.f32.mrb[0].mxu0
        %v730 = vadd.f32 %v449, %v729
        %v731 = vpop.f32.mrb[0].mxu0
        %732 = vmatprep.mubr.bf16.mxu0 0
        %733 = vmatmul.mubr.bf16.gmra.mrb[0].mxu0 %v593
        %v734 = vpop.f32.mrb[0].mxu0
        %v735 = vadd.f32 %v449, %v734
        %v736 = vpop.f32.mrb[0].mxu0
        %v737 = vpop.f32.mrb[0].mxu0
        %v738 = vadd.f32 %v449, %v737
        %v739 = vpop.f32.mrb[0].mxu0
        %740 = vmatprep.mubr.bf16.mxu0 0
        %741 = vmatmul.mubr.bf16.gmra.mrb[0].mxu0 %v596
        %v742 = vpop.f32.mrb[0].mxu0
        %v743 = vadd.f32 %v449, %v742
        %v744 = vpop.f32.mrb[0].mxu0
        %v745 = vpop.f32.mrb[0].mxu0
        %v746 = vadd.f32 %v449, %v745
        %v747 = vpop.f32.mrb[0].mxu0
        %748 = vmatprep.mubr.bf16.mxu0 0
        %749 = vmatmul.mubr.bf16.gmra.mrb[0].mxu0 %v599
        %v750 = vpop.f32.mrb[0].mxu0
        %v751 = vadd.f32 %v449, %v750
        %v752 = vpop.f32.mrb[0].mxu0
        %v753 = vpop.f32.mrb[0].mxu0
        %v754 = vadd.f32 %v449, %v753
        %v755 = vpop.f32.mrb[0].mxu0
        %756 = vmatprep.mubr.bf16.mxu0 0
        %757 = vmatmul.mubr.bf16.gmra.mrb[0].mxu0 %v602
        %v758 = vpop.f32.mrb[0].mxu0
        %v759 = vadd.f32 %v449, %v758
        %v760 = vpop.f32.mrb[0].mxu0
        %v761 = vpop.f32.mrb[0].mxu0
        %v762 = vadd.f32 %v449, %v761
        %v763 = vpop.f32.mrb[0].mxu0
        %764 = vdwg.mxu0
        %v765 = vmax.f32 %v639, 0.0
        %v766 = vmax.f32 %v642, 0.0
        %v767 = vmax.f32 %v647, 0.0
        %v768 = vmax.f32 %v650, 0.0
        %v769 = vmax.f32 %v655, 0.0
        %v770 = vmax.f32 %v658, 0.0
        %v771 = vmax.f32 %v663, 0.0
        %v772 = vmax.f32 %v666, 0.0
        %v773 = vmax.f32 %v671, 0.0
        %v774 = vmax.f32 %v674, 0.0
        %v775 = vmax.f32 %v679, 0.0
        %v776 = vmax.f32 %v682, 0.0
        %v777 = vmax.f32 %v687, 0.0
        %v778 = vmax.f32 %v690, 0.0
        %v779 = vmax.f32 %v695, 0.0
        %v780 = vmax.f32 %v698, 0.0
        %v781 = vmax.f32 %v703, 0.0
        %v782 = vmax.f32 %v706, 0.0
        %v783 = vmax.f32 %v711, 0.0
        %v784 = vmax.f32 %v714, 0.0
        %v785 = vmax.f32 %v719, 0.0
        %v786 = vmax.f32 %v722, 0.0
        %v787 = vmax.f32 %v727, 0.0
        %v788 = vmax.f32 %v730, 0.0
        %v789 = vmax.f32 %v735, 0.0
        %v790 = vmax.f32 %v738, 0.0
        %v791 = vmax.f32 %v743, 0.0
        %v792 = vmax.f32 %v746, 0.0
        %v793 = vmax.f32 %v751, 0.0
        %v794 = vmax.f32 %v754, 0.0
        %v795 = vmax.f32 %v759, 0.0
        %v796 = vmax.f32 %v762, 0.0
        %v797 = vlaneseq
        %v798 = vand.u32 %v797, 127
        %799 = vset.pattern.permute.xlu0 0
        %800 = vperm.xlu0 %799, %v435
        %v801 = vpop.permute.xlu0 %800
        %vm802 = vcmp.eq.s32.totalorder %v801, %v798
        %v803 = vsel %vm802, 1, 0
        %v804 = vcvt.s32.f32 %v803
        %v805 = vpack.c.bf16 %v804, %v804
        %v806 = vld [vmem:[%s2] sm:$0xf]
        %v807 = vld [vmem:[%s2 + $0x4] sm:$0xf]
        %v808 = vld [vmem:[%s2 + $0x8] sm:$0xf]
        %v809 = vld [vmem:[%s2 + $0xc] sm:$0xf]
        %v810 = vld [vmem:[%s2 + $0x10] sm:$0xf]
        %v811 = vld [vmem:[%s2 + $0x14] sm:$0xf]
        %v812 = vld [vmem:[%s2 + $0x18] sm:$0xf]
        %v813 = vld [vmem:[%s2 + $0x1c] sm:$0xf]
        %v822 = vunpack.c.l.b16 %v806
        %v823 = vunpack.c.l.b16 %v807
        %v824 = vunpack.c.l.b16 %v808
        %v825 = vunpack.c.l.b16 %v809
        %v826 = vunpack.c.l.b16 %v810
        %v827 = vunpack.c.l.b16 %v811
        %v828 = vunpack.c.l.b16 %v812
        %v829 = vunpack.c.l.b16 %v813
        %v830 = vpack.c.b16 %v823, %v822
        %v831 = vpack.c.b16 %v825, %v824
        %v832 = vpack.c.b16 %v827, %v826
        %v833 = vpack.c.b16 %v829, %v828
        %v839 = vsel %vm555, %v805, 0
        %841 = vmatprep.subr.bf16.mxu0 0
        %842 = vmatpush1.bf16.msra.mxu0 %v830
        %843 = vmatprep.subr.bf16.mxu0 0
        %844 = vmatpush1.bf16.msra.mxu0 %v831
        %845 = vmatprep.subr.bf16.mxu0 0
        %846 = vmatpush1.bf16.msra.mxu0 %v832
        %847 = vmatprep.subr.bf16.mxu0 0
        %848 = vmatpush1.bf16.msra.mxu0 %v833
        %849 = vmatprep.subr.bf16.mxu0 0
        %850 = vmatpush1.bf16.msra.mxu0 0
        %851 = vmatprep.subr.bf16.mxu0 0
        %852 = vmatpush1.bf16.msra.mxu0 0
        %853 = vmatprep.subr.bf16.mxu0 0
        %854 = vmatpush1.bf16.msra.mxu0 0
        %855 = vmatprep.subr.bf16.mxu0 0
        %856 = vmatpush1.bf16.msra.mxu0 0
        %857 = vmatprep.subr.bf16.mxu0 0
        %858 = vmatpush1.bf16.msra.mxu0 0
        %859 = vmatprep.subr.bf16.mxu0 0
        %860 = vmatpush1.bf16.msra.mxu0 0
        %861 = vmatprep.subr.bf16.mxu0 0
        %862 = vmatpush1.bf16.msra.mxu0 0
        %863 = vmatprep.subr.bf16.mxu0 0
        %864 = vmatpush1.bf16.msra.mxu0 0
        %865 = vmatprep.subr.bf16.mxu0 0
        %866 = vmatpush1.bf16.msra.mxu0 0
        %867 = vmatprep.subr.bf16.mxu0 0
        %868 = vmatpush1.bf16.msra.mxu0 0
        %869 = vmatprep.subr.bf16.mxu0 0
        %870 = vmatpush1.bf16.msra.mxu0 0
        %871 = vmatprep.subr.bf16.mxu0 0
        %872 = vmatpush1.bf16.msra.mxu0 0
        %873 = vmatprep.mubr.bf16.mxu0 0
        %874 = vmatmul.mubr.bf16.gmra.mrb[0].mxu0 %v839
        %v875 = vpop.f32.mrb[0].mxu0
        %v876 = vadd.f32 0.0, %v875
        %v877 = vpop.f32.mrb[0].mxu0
        %v878 = vpop.f32.mrb[0].mxu0
        %v879 = vpop.f32.mrb[0].mxu0
        %880 = vdwg.mxu0
        %v881 = vpack.c.bf16 %v766, %v765
        %v882 = vpack.c.bf16 %v768, %v767
        %v883 = vpack.c.bf16 %v770, %v769
        %v884 = vpack.c.bf16 %v772, %v771
        %v885 = vpack.c.bf16 %v774, %v773
        %v886 = vpack.c.bf16 %v776, %v775
        %v887 = vpack.c.bf16 %v778, %v777
        %v888 = vpack.c.bf16 %v780, %v779
        %v889 = vpack.c.bf16 %v782, %v781
        %v890 = vpack.c.bf16 %v784, %v783
        %v891 = vpack.c.bf16 %v786, %v785
        %v892 = vpack.c.bf16 %v788, %v787
        %v893 = vpack.c.bf16 %v790, %v789
        %v894 = vpack.c.bf16 %v792, %v791
        %v895 = vpack.c.bf16 %v794, %v793
        %v896 = vpack.c.bf16 %v796, %v795
        %v897 = vld [vmem:[%s7] sm:$0xf]
        %v898 = vld [vmem:[%s7 + $0x4] sm:$0xf]
        %v899 = vld [vmem:[%s7 + $0x8] sm:$0xf]
        %v900 = vld [vmem:[%s7 + $0xc] sm:$0xf]
        %v901 = vld [vmem:[%s8] sm:$0x1]
        %v903 = vlaneseq
        %v904 = vshrl.u32 %v903, 7
        %v905 = vsub.s32 0, %v904
        %v906 = vrot.slane %v901, %v905
        %v912 = vunpack.c.l.b16 %v897
        %v913 = vunpack.c.l.b16 %v898
        %v914 = vunpack.c.l.b16 %v899
        %v915 = vunpack.c.l.b16 %v900
        %v916 = vpack.c.b16 %v913, %v912
        %v917 = vpack.c.b16 %v915, %v914
        %vm920 = vcmask 261120
        %v922 = vsel %vm920, %v881, 0
        %v925 = vsel %vm920, %v882, 0
        %v928 = vsel %vm920, %v883, 0
        %v931 = vsel %vm920, %v884, 0
        %v934 = vsel %vm920, %v885, 0
        %v937 = vsel %vm920, %v886, 0
        %v940 = vsel %vm920, %v887, 0
        %v943 = vsel %vm920, %v888, 0
        %v946 = vsel %vm920, %v889, 0
        %v949 = vsel %vm920, %v890, 0
        %v952 = vsel %vm920, %v891, 0
        %v955 = vsel %vm920, %v892, 0
        %v958 = vsel %vm920, %v893, 0
        %v961 = vsel %vm920, %v894, 0
        %v964 = vsel %vm920, %v895, 0
        %v967 = vsel %vm920, %v896, 0
        %969 = vmatprep.subr.bf16.mxu0 0
        %970 = vmatpush1.bf16.msra.mxu0 %v916
        %971 = vmatprep.subr.bf16.mxu0 0
        %972 = vmatpush1.bf16.msra.mxu0 %v917
        %973 = vmatprep.subr.bf16.mxu0 0
        %974 = vmatpush1.bf16.msra.mxu0 0
        %975 = vmatprep.subr.bf16.mxu0 0
        %976 = vmatpush1.bf16.msra.mxu0 0
        %977 = vmatprep.subr.bf16.mxu0 0
        %978 = vmatpush1.bf16.msra.mxu0 0
        %979 = vmatprep.subr.bf16.mxu0 0
        %980 = vmatpush1.bf16.msra.mxu0 0
        %981 = vmatprep.subr.bf16.mxu0 0
        %982 = vmatpush1.bf16.msra.mxu0 0
        %983 = vmatprep.subr.bf16.mxu0 0
        %984 = vmatpush1.bf16.msra.mxu0 0
        %985 = vmatprep.subr.bf16.mxu0 0
        %986 = vmatpush1.bf16.msra.mxu0 0
        %987 = vmatprep.subr.bf16.mxu0 0
        %988 = vmatpush1.bf16.msra.mxu0 0
        %989 = vmatprep.subr.bf16.mxu0 0
        %990 = vmatpush1.bf16.msra.mxu0 0
        %991 = vmatprep.subr.bf16.mxu0 0
        %992 = vmatpush1.bf16.msra.mxu0 0
        %993 = vmatprep.subr.bf16.mxu0 0
        %994 = vmatpush1.bf16.msra.mxu0 0
        %995 = vmatprep.subr.bf16.mxu0 0
        %996 = vmatpush1.bf16.msra.mxu0 0
        %997 = vmatprep.subr.bf16.mxu0 0
        %998 = vmatpush1.bf16.msra.mxu0 0
        %999 = vmatprep.subr.bf16.mxu0 0
        %1000 = vmatpush1.bf16.msra.mxu0 0
        %1001 = vmatprep.mubr.bf16.mxu0 0
        %1002 = vmatmul.mubr.bf16.gmra.mrb[0].mxu0 %v922
        %v1003 = vpop.f32.mrb[0].mxu0
        %v1004 = vadd.f32 %v906, %v1003
        %v1005 = vpop.f32.mrb[0].mxu0
        %v1006 = vpop.f32.mrb[0].mxu0
        %v1007 = vadd.f32 %v906, %v1006
        %v1008 = vpop.f32.mrb[0].mxu0
        %1009 = vmatprep.mubr.bf16.mxu0 0
        %1010 = vmatmul.mubr.bf16.gmra.mrb[0].mxu0 %v925
        %v1011 = vpop.f32.mrb[0].mxu0
        %v1012 = vadd.f32 %v906, %v1011
        %v1013 = vpop.f32.mrb[0].mxu0
        %v1014 = vpop.f32.mrb[0].mxu0
        %v1015 = vadd.f32 %v906, %v1014
        %v1016 = vpop.f32.mrb[0].mxu0
        %1017 = vmatprep.mubr.bf16.mxu0 0
        %1018 = vmatmul.mubr.bf16.gmra.mrb[0].mxu0 %v928
        %v1019 = vpop.f32.mrb[0].mxu0
        %v1020 = vadd.f32 %v906, %v1019
        %v1021 = vpop.f32.mrb[0].mxu0
        %v1022 = vpop.f32.mrb[0].mxu0
        %v1023 = vadd.f32 %v906, %v1022
        %v1024 = vpop.f32.mrb[0].mxu0
        %1025 = vmatprep.mubr.bf16.mxu0 0
        %1026 = vmatmul.mubr.bf16.gmra.mrb[0].mxu0 %v931
        %v1027 = vpop.f32.mrb[0].mxu0
        %v1028 = vadd.f32 %v906, %v1027
        %v1029 = vpop.f32.mrb[0].mxu0
        %v1030 = vpop.f32.mrb[0].mxu0
        %v1031 = vadd.f32 %v906, %v1030
        %v1032 = vpop.f32.mrb[0].mxu0
        %1033 = vmatprep.mubr.bf16.mxu0 0
        %1034 = vmatmul.mubr.bf16.gmra.mrb[0].mxu0 %v934
        %v1035 = vpop.f32.mrb[0].mxu0
        %v1036 = vadd.f32 %v906, %v1035
        %v1037 = vpop.f32.mrb[0].mxu0
        %v1038 = vpop.f32.mrb[0].mxu0
        %v1039 = vadd.f32 %v906, %v1038
        %v1040 = vpop.f32.mrb[0].mxu0
        %1041 = vmatprep.mubr.bf16.mxu0 0
        %1042 = vmatmul.mubr.bf16.gmra.mrb[0].mxu0 %v937
        %v1043 = vpop.f32.mrb[0].mxu0
        %v1044 = vadd.f32 %v906, %v1043
        %v1045 = vpop.f32.mrb[0].mxu0
        %v1046 = vpop.f32.mrb[0].mxu0
        %v1047 = vadd.f32 %v906, %v1046
        %v1048 = vpop.f32.mrb[0].mxu0
        %1049 = vmatprep.mubr.bf16.mxu0 0
        %1050 = vmatmul.mubr.bf16.gmra.mrb[0].mxu0 %v940
        %v1051 = vpop.f32.mrb[0].mxu0
        %v1052 = vadd.f32 %v906, %v1051
        %v1053 = vpop.f32.mrb[0].mxu0
        %v1054 = vpop.f32.mrb[0].mxu0
        %v1055 = vadd.f32 %v906, %v1054
        %v1056 = vpop.f32.mrb[0].mxu0
        %1057 = vmatprep.mubr.bf16.mxu0 0
        %1058 = vmatmul.mubr.bf16.gmra.mrb[0].mxu0 %v943
        %v1059 = vpop.f32.mrb[0].mxu0
        %v1060 = vadd.f32 %v906, %v1059
        %v1061 = vpop.f32.mrb[0].mxu0
        %v1062 = vpop.f32.mrb[0].mxu0
        %v1063 = vadd.f32 %v906, %v1062
        %v1064 = vpop.f32.mrb[0].mxu0
        %1065 = vmatprep.mubr.bf16.mxu0 0
        %1066 = vmatmul.mubr.bf16.gmra.mrb[0].mxu0 %v946
        %v1067 = vpop.f32.mrb[0].mxu0
        %v1068 = vadd.f32 %v906, %v1067
        %v1069 = vpop.f32.mrb[0].mxu0
        %v1070 = vpop.f32.mrb[0].mxu0
        %v1071 = vadd.f32 %v906, %v1070
        %v1072 = vpop.f32.mrb[0].mxu0
        %1073 = vmatprep.mubr.bf16.mxu0 0
        %1074 = vmatmul.mubr.bf16.gmra.mrb[0].mxu0 %v949
        %v1075 = vpop.f32.mrb[0].mxu0
        %v1076 = vadd.f32 %v906, %v1075
        %v1077 = vpop.f32.mrb[0].mxu0
        %v1078 = vpop.f32.mrb[0].mxu0
        %v1079 = vadd.f32 %v906, %v1078
        %v1080 = vpop.f32.mrb[0].mxu0
        %1081 = vmatprep.mubr.bf16.mxu0 0
        %1082 = vmatmul.mubr.bf16.gmra.mrb[0].mxu0 %v952
        %v1083 = vpop.f32.mrb[0].mxu0
        %v1084 = vadd.f32 %v906, %v1083
        %v1085 = vpop.f32.mrb[0].mxu0
        %v1086 = vpop.f32.mrb[0].mxu0
        %v1087 = vadd.f32 %v906, %v1086
        %v1088 = vpop.f32.mrb[0].mxu0
        %1089 = vmatprep.mubr.bf16.mxu0 0
        %1090 = vmatmul.mubr.bf16.gmra.mrb[0].mxu0 %v955
        %v1091 = vpop.f32.mrb[0].mxu0
        %v1092 = vadd.f32 %v906, %v1091
        %v1093 = vpop.f32.mrb[0].mxu0
        %v1094 = vpop.f32.mrb[0].mxu0
        %v1095 = vadd.f32 %v906, %v1094
        %v1096 = vpop.f32.mrb[0].mxu0
        %1097 = vmatprep.mubr.bf16.mxu0 0
        %1098 = vmatmul.mubr.bf16.gmra.mrb[0].mxu0 %v958
        %v1099 = vpop.f32.mrb[0].mxu0
        %v1100 = vadd.f32 %v906, %v1099
        %v1101 = vpop.f32.mrb[0].mxu0
        %v1102 = vpop.f32.mrb[0].mxu0
        %v1103 = vadd.f32 %v906, %v1102
        %v1104 = vpop.f32.mrb[0].mxu0
        %1105 = vmatprep.mubr.bf16.mxu0 0
        %1106 = vmatmul.mubr.bf16.gmra.mrb[0].mxu0 %v961
        %v1107 = vpop.f32.mrb[0].mxu0
        %v1108 = vadd.f32 %v906, %v1107
        %v1109 = vpop.f32.mrb[0].mxu0
        %v1110 = vpop.f32.mrb[0].mxu0
        %v1111 = vadd.f32 %v906, %v1110
        %v1112 = vpop.f32.mrb[0].mxu0
        %1113 = vmatprep.mubr.bf16.mxu0 0
        %1114 = vmatmul.mubr.bf16.gmra.mrb[0].mxu0 %v964
        %v1115 = vpop.f32.mrb[0].mxu0
        %v1116 = vadd.f32 %v906, %v1115
        %v1117 = vpop.f32.mrb[0].mxu0
        %v1118 = vpop.f32.mrb[0].mxu0
        %v1119 = vadd.f32 %v906, %v1118
        %v1120 = vpop.f32.mrb[0].mxu0
        %1121 = vmatprep.mubr.bf16.mxu0 0
        %1122 = vmatmul.mubr.bf16.gmra.mrb[0].mxu0 %v967
        %v1123 = vpop.f32.mrb[0].mxu0
        %v1124 = vadd.f32 %v906, %v1123
        %v1125 = vpop.f32.mrb[0].mxu0
        %v1126 = vpop.f32.mrb[0].mxu0
        %v1127 = vadd.f32 %v906, %v1126
        %v1128 = vpop.f32.mrb[0].mxu0
        %1129 = vdwg.mxu0
        %v1130 = vpack.c.bf16 %v1007, %v1004
        %v1131 = vpack.c.bf16 %v1015, %v1012
        %v1132 = vpack.c.bf16 %v1023, %v1020
        %v1133 = vpack.c.bf16 %v1031, %v1028
        %v1134 = vpack.c.bf16 %v1039, %v1036
        %v1135 = vpack.c.bf16 %v1047, %v1044
        %v1136 = vpack.c.bf16 %v1055, %v1052
        %v1137 = vpack.c.bf16 %v1063, %v1060
        %v1138 = vpack.c.bf16 %v1071, %v1068
        %v1139 = vpack.c.bf16 %v1079, %v1076
        %v1140 = vpack.c.bf16 %v1087, %v1084
        %v1141 = vpack.c.bf16 %v1095, %v1092
        %v1142 = vpack.c.bf16 %v1103, %v1100
        %v1143 = vpack.c.bf16 %v1111, %v1108
        %v1144 = vpack.c.bf16 %v1119, %v1116
        %v1145 = vpack.c.bf16 %v1127, %v1124
        %v1146 = vpack.c.bf16 %v876, %v876
        %v1147 = vld [vmem:[%s5] sm:$0xf]
        %v1148 = vld [vmem:[%s5 + $0x4] sm:$0xf]
        %v1149 = vld [vmem:[%s5 + $0x8] sm:$0xf]
        %v1150 = vld [vmem:[%s5 + $0xc] sm:$0xf]
        %v1151 = vld [vmem:[%s6] sm:$0x1]
        %v1153 = vlaneseq
        %v1154 = vshrl.u32 %v1153, 7
        %v1155 = vsub.s32 0, %v1154
        %v1156 = vrot.slane %v1151, %v1155
        %v1162 = vunpack.c.l.b16 %v1147
        %v1163 = vunpack.c.l.b16 %v1148
        %v1164 = vunpack.c.l.b16 %v1149
        %v1165 = vunpack.c.l.b16 %v1150
        %v1166 = vpack.c.b16 %v1163, %v1162
        %v1167 = vpack.c.b16 %v1165, %v1164
        %v1171 = vsel %vm920, %v1146, 0
        %1173 = vmatprep.subr.bf16.mxu0 0
        %1174 = vmatpush1.bf16.msra.mxu0 %v1166
        %1175 = vmatprep.subr.bf16.mxu0 0
        %1176 = vmatpush1.bf16.msra.mxu0 %v1167
        %1177 = vmatprep.subr.bf16.mxu0 0
        %1178 = vmatpush1.bf16.msra.mxu0 0
        %1179 = vmatprep.subr.bf16.mxu0 0
        %1180 = vmatpush1.bf16.msra.mxu0 0
        %1181 = vmatprep.subr.bf16.mxu0 0
        %1182 = vmatpush1.bf16.msra.mxu0 0
        %1183 = vmatprep.subr.bf16.mxu0 0
        %1184 = vmatpush1.bf16.msra.mxu0 0
        %1185 = vmatprep.subr.bf16.mxu0 0
        %1186 = vmatpush1.bf16.msra.mxu0 0
        %1187 = vmatprep.subr.bf16.mxu0 0
        %1188 = vmatpush1.bf16.msra.mxu0 0
        %1189 = vmatprep.subr.bf16.mxu0 0
        %1190 = vmatpush1.bf16.msra.mxu0 0
        %1191 = vmatprep.subr.bf16.mxu0 0
        %1192 = vmatpush1.bf16.msra.mxu0 0
        %1193 = vmatprep.subr.bf16.mxu0 0
        %1194 = vmatpush1.bf16.msra.mxu0 0
        %1195 = vmatprep.subr.bf16.mxu0 0
        %1196 = vmatpush1.bf16.msra.mxu0 0
        %1197 = vmatprep.subr.bf16.mxu0 0
        %1198 = vmatpush1.bf16.msra.mxu0 0
        %1199 = vmatprep.subr.bf16.mxu0 0
        %1200 = vmatpush1.bf16.msra.mxu0 0
        %1201 = vmatprep.subr.bf16.mxu0 0
        %1202 = vmatpush1.bf16.msra.mxu0 0
        %1203 = vmatprep.subr.bf16.mxu0 0
        %1204 = vmatpush1.bf16.msra.mxu0 0
        %1205 = vmatprep.mubr.bf16.mxu0 0
        %1206 = vmatmul.mubr.bf16.gmra.mrb[0].mxu0 %v1171
        %v1207 = vpop.f32.mrb[0].mxu0
        %v1208 = vadd.f32 %v1156, %v1207
        %v1209 = vpop.f32.mrb[0].mxu0
        %v1210 = vpop.f32.mrb[0].mxu0
        %v1211 = vpop.f32.mrb[0].mxu0
        %1212 = vdwg.mxu0
        %v1213 = vpack.c.bf16 %v1208, %v1208
        %v1215 = vsel %vm555, %v1213, 0
        %v1218 = vsel %vm555, %v1130, 0
        %v1221 = vsel %vm555, %v1131, 0
        %v1224 = vsel %vm555, %v1132, 0
        %v1227 = vsel %vm555, %v1133, 0
        %v1230 = vsel %vm555, %v1134, 0
        %v1233 = vsel %vm555, %v1135, 0
        %v1236 = vsel %vm555, %v1136, 0
        %v1239 = vsel %vm555, %v1137, 0
        %v1242 = vsel %vm555, %v1138, 0
        %v1245 = vsel %vm555, %v1139, 0
        %v1248 = vsel %vm555, %v1140, 0
        %v1251 = vsel %vm555, %v1141, 0
        %v1254 = vsel %vm555, %v1142, 0
        %v1257 = vsel %vm555, %v1143, 0
        %v1260 = vsel %vm555, %v1144, 0
        %v1263 = vsel %vm555, %v1145, 0
        %1265 = vmatprep.subr.bf16.mxu0 0
        %1266 = vmatpush1.bf16.xpose.msra.mxu0 %v1218
        %1267 = vmatprep.subr.bf16.mxu0 0
        %1268 = vmatpush1.bf16.xpose.msra.mxu0 %v1221
        %1269 = vmatprep.subr.bf16.mxu0 0
        %1270 = vmatpush1.bf16.xpose.msra.mxu0 %v1224
        %1271 = vmatprep.subr.bf16.mxu0 0
        %1272 = vmatpush1.bf16.xpose.msra.mxu0 %v1227
        %1273 = vmatprep.subr.bf16.mxu0 0
        %1274 = vmatpush1.bf16.xpose.msra.mxu0 %v1230
        %1275 = vmatprep.subr.bf16.mxu0 0
        %1276 = vmatpush1.bf16.xpose.msra.mxu0 %v1233
        %1277 = vmatprep.subr.bf16.mxu0 0
        %1278 = vmatpush1.bf16.xpose.msra.mxu0 %v1236
        %1279 = vmatprep.subr.bf16.mxu0 0
        %1280 = vmatpush1.bf16.xpose.msra.mxu0 %v1239
        %1281 = vmatprep.subr.bf16.mxu0 0
        %1282 = vmatpush1.bf16.xpose.msra.mxu0 %v1242
        %1283 = vmatprep.subr.bf16.mxu0 0
        %1284 = vmatpush1.bf16.xpose.msra.mxu0 %v1245
        %1285 = vmatprep.subr.bf16.mxu0 0
        %1286 = vmatpush1.bf16.xpose.msra.mxu0 %v1248
        %1287 = vmatprep.subr.bf16.mxu0 0
        %1288 = vmatpush1.bf16.xpose.msra.mxu0 %v1251
        %1289 = vmatprep.subr.bf16.mxu0 0
        %1290 = vmatpush1.bf16.xpose.msra.mxu0 %v1254
        %1291 = vmatprep.subr.bf16.mxu0 0
        %1292 = vmatpush1.bf16.xpose.msra.mxu0 %v1257
        %1293 = vmatprep.subr.bf16.mxu0 0
        %1294 = vmatpush1.bf16.xpose.msra.mxu0 %v1260
        %1295 = vmatprep.subr.bf16.mxu0 0
        %1296 = vmatpush1.bf16.xpose.msra.mxu0 %v1263
        %1297 = vmatprep.mubr.bf16.mxu0 0
        %1298 = vmatmul.mubr.bf16.gmra.mrb[0].mxu0 %v1215
        %v1299 = vpop.f32.mrb[0].mxu0
        %v1300 = vadd.f32 0.0, %v1299
        %v1301 = vpop.f32.mrb[0].mxu0
        %v1302 = vadd.f32 0.0, %v1301
        %v1303 = vpop.f32.mrb[0].mxu0
        %v1304 = vpop.f32.mrb[0].mxu0
        %1305 = vdwg.mxu0
        %v1306 = vmax.f32 %v1300, %v1302
        %1307 = vmax.xlane.f32.xlu0 %v1306
        %v1308 = vpop.xlane.xlu0 %1307
        %v1309 = vsub.f32 %v1300, %v1308
        %v1310 = vsub.f32 %v1302, %v1308
        %v1311 = vmul.f32 %v1309, 1.442695
        %v1312 = vpow.pop %v1311
        %v1313 = vmul.f32 %v1310, 1.442695
        %v1314 = vpow.pop %v1313
        %v1315 = vadd.f32 %v1312, %v1314
        %1316 = vadd.xlane.f32.xlu0 %v1315
        %v1317 = vpop.xlane.xlu0 %1316
        %v1318 = vrcp.pop %v1317
        %v1319 = vmul.f32 %v1312, %v1318
        %v1320 = vmul.f32 %v1314, %v1318
        %v1321 = vpack.c.bf16 %v1319, %v1319
        %v1322 = vpack.c.bf16 %v1320, %v1320
        %1323 = vmatprep.subr.bf16.mxu0 0
        %1324 = vmatpush1.bf16.msra.mxu0 %v1130
        %1325 = vmatprep.subr.bf16.mxu0 0
        %1326 = vmatpush1.bf16.msra.mxu0 %v1131
        %1327 = vmatprep.subr.bf16.mxu0 0
        %1328 = vmatpush1.bf16.msra.mxu0 %v1132
        %1329 = vmatprep.subr.bf16.mxu0 0
        %1330 = vmatpush1.bf16.msra.mxu0 %v1133
        %1331 = vmatprep.subr.bf16.mxu0 0
        %1332 = vmatpush1.bf16.msra.mxu0 %v1134
        %1333 = vmatprep.subr.bf16.mxu0 0
        %1334 = vmatpush1.bf16.msra.mxu0 %v1135
        %1335 = vmatprep.subr.bf16.mxu0 0
        %1336 = vmatpush1.bf16.msra.mxu0 %v1136
        %1337 = vmatprep.subr.bf16.mxu0 0
        %1338 = vmatpush1.bf16.msra.mxu0 %v1137
        %1339 = vmatprep.subr.bf16.mxu0 0
        %1340 = vmatpush1.bf16.msra.mxu0 %v1138
        %1341 = vmatprep.subr.bf16.mxu0 0
        %1342 = vmatpush1.bf16.msra.mxu0 %v1139
        %1343 = vmatprep.subr.bf16.mxu0 0
        %1344 = vmatpush1.bf16.msra.mxu0 %v1140
        %1345 = vmatprep.subr.bf16.mxu0 0
        %1346 = vmatpush1.bf16.msra.mxu0 %v1141
        %1347 = vmatprep.subr.bf16.mxu0 0
        %1348 = vmatpush1.bf16.msra.mxu0 %v1142
        %1349 = vmatprep.subr.bf16.mxu0 0
        %1350 = vmatpush1.bf16.msra.mxu0 %v1143
        %1351 = vmatprep.subr.bf16.mxu0 0
        %1352 = vmatpush1.bf16.msra.mxu0 %v1144
        %1353 = vmatprep.subr.bf16.mxu0 0
        %1354 = vmatpush1.bf16.msra.mxu0 %v1145
        %1355 = vmatprep.mubr.bf16.mxu0 %v1322
        %1356 = vmatmul.mubr.bf16.gmra.mrb[0].mxu0 %v1321
        %v1357 = vpop.f32.mrb[0].mxu0
        %v1358 = vadd.f32 0.0, %v1357
        %v1359 = vpop.f32.mrb[0].mxu0
        %v1360 = vpop.f32.mrb[0].mxu0
        %v1361 = vpop.f32.mrb[0].mxu0
        %1362 = vdwg.mxu0
        %v1363 = vpack.c.bf16 %v1358, %v1358
        %v1364 = vld [vmem:[%s9] sm:$0xf]
        %v1365 = vld [vmem:[%s9 + $0x4] sm:$0xf]
        %v1366 = vld [vmem:[%s9 + $0x8] sm:$0xf]
        %v1367 = vld [vmem:[%s9 + $0xc] sm:$0xf]
        %v1368 = vld [vmem:[%s9 + $0x10] sm:$0xf]
        %v1369 = vld [vmem:[%s9 + $0x14] sm:$0xf]
        %v1370 = vld [vmem:[%s9 + $0x18] sm:$0xf]
        %v1371 = vld [vmem:[%s9 + $0x1c] sm:$0xf]
        %v1372 = vld [vmem:[%s10] sm:$0x1]
        %v1374 = vlaneseq
        %v1375 = vshrl.u32 %v1374, 7
        %v1376 = vsub.s32 0, %v1375
        %v1377 = vrot.slane %v1372, %v1376
        %v1387 = vunpack.c.l.b16 %v1364
        %v1388 = vunpack.c.l.b16 %v1365
        %v1389 = vunpack.c.l.b16 %v1366
        %v1390 = vunpack.c.l.b16 %v1367
        %v1391 = vunpack.c.l.b16 %v1368
        %v1392 = vunpack.c.l.b16 %v1369
        %v1393 = vunpack.c.l.b16 %v1370
        %v1394 = vunpack.c.l.b16 %v1371
        %v1395 = vpack.c.b16 %v1388, %v1387
        %v1396 = vpack.c.b16 %v1390, %v1389
        %v1397 = vpack.c.b16 %v1392, %v1391
        %v1398 = vpack.c.b16 %v1394, %v1393
        %v1404 = vsel %vm555, %v1363, 0
        %1406 = vmatprep.subr.bf16.mxu0 0
        %1407 = vmatpush1.bf16.msra.mxu0 %v1395
        %1408 = vmatprep.subr.bf16.mxu0 0
        %1409 = vmatpush1.bf16.msra.mxu0 %v1396
        %1410 = vmatprep.subr.bf16.mxu0 0
        %1411 = vmatpush1.bf16.msra.mxu0 %v1397
        %1412 = vmatprep.subr.bf16.mxu0 0
        %1413 = vmatpush1.bf16.msra.mxu0 %v1398
        %1414 = vmatprep.subr.bf16.mxu0 0
        %1415 = vmatpush1.bf16.msra.mxu0 0
        %1416 = vmatprep.subr.bf16.mxu0 0
        %1417 = vmatpush1.bf16.msra.mxu0 0
        %1418 = vmatprep.subr.bf16.mxu0 0
        %1419 = vmatpush1.bf16.msra.mxu0 0
        %1420 = vmatprep.subr.bf16.mxu0 0
        %1421 = vmatpush1.bf16.msra.mxu0 0
        %1422 = vmatprep.subr.bf16.mxu0 0
        %1423 = vmatpush1.bf16.msra.mxu0 0
        %1424 = vmatprep.subr.bf16.mxu0 0
        %1425 = vmatpush1.bf16.msra.mxu0 0
        %1426 = vmatprep.subr.bf16.mxu0 0
        %1427 = vmatpush1.bf16.msra.mxu0 0
        %1428 = vmatprep.subr.bf16.mxu0 0
        %1429 = vmatpush1.bf16.msra.mxu0 0
        %1430 = vmatprep.subr.bf16.mxu0 0
        %1431 = vmatpush1.bf16.msra.mxu0 0
        %1432 = vmatprep.subr.bf16.mxu0 0
        %1433 = vmatpush1.bf16.msra.mxu0 0
        %1434 = vmatprep.subr.bf16.mxu0 0
        %1435 = vmatpush1.bf16.msra.mxu0 0
        %1436 = vmatprep.subr.bf16.mxu0 0
        %1437 = vmatpush1.bf16.msra.mxu0 0
        %1438 = vmatprep.mubr.bf16.mxu0 0
        %1439 = vmatmul.mubr.bf16.gmra.mrb[0].mxu0 %v1404
        %v1440 = vpop.f32.mrb[0].mxu0
        %v1441 = vadd.f32 %v1377, %v1440
        %v1442 = vpop.f32.mrb[0].mxu0
        %v1443 = vpop.f32.mrb[0].mxu0
        %v1444 = vpop.f32.mrb[0].mxu0
        %1445 = vdwg.mxu0
        %1446 = vst [vmem:[%s392] sm:$0xff] %v1441
        %s1447 = sand.u32 %s274, 1
        %s1448 = scalar_lea.sflag [#allocation3], %s1447
        %s1449 = sand.u32 %s274, 1
        %s1450 = smul.addr %s1449, 8
        %s1451 = scalar_lea.vmem [#allocation2], %s1450
        // Predicated region
        $region65: #{encoder_decoder_forward.1} parent=63 // pred_check
          %p1452 = pneg %p284
        $region66: #{encoder_decoder_forward.1} parent=63 // pred_check_branch
          %1454 = sbr.rel (%p1452) target = $region68
        $region67: #{encoder_decoder_forward.1} parent=63 // pred_region
          %s1456 = ssub.s32 128, 128
          %1457 = vsyncadd %s1448, %s1456
          %s1458 = smul.addr %s25, 128
          %s1459 = scalar_lea.hbm %s11, %s1458
          %s1461 = sshll.u32 %s1451, 4
          %s1462 = int_to_ptr.vmem [resolvable:$true] %s1461
          %1464 = dma.vmem_to_hbm [thread:$0]  %s1462, 128, %s1459, %s1448
        $region68: #{encoder_decoder_forward.1} parent=63 // pred_fallthru
          _
      $region64: #{encoder_decoder_forward.1} parent=5 // pred_fallthru
        _
      %p1465 = scmp.le.s32.totalorder 2, %s20
      // Predicated region
      $region69: #{encoder_decoder_forward.1} parent=5 // pred_check
        %p1466 = pneg %p1465
      $region70: #{encoder_decoder_forward.1} parent=5 // pred_check_branch
        %1468 = sbr.rel (%p1466) target = $region72
      $region71: #{encoder_decoder_forward.1} parent=5 // pred_region
        %s1469 = ssub.s32 %s20, 2
        // Predicated region
        $region73: #{encoder_decoder_forward.1} parent=71 // pred_check
          %p1470 = pneg %p290
        $region74: #{encoder_decoder_forward.1} parent=71 // pred_check_branch
          %1472 = sbr.rel (%p1470) target = $region76
        $region75: #{encoder_decoder_forward.1} parent=71 // pred_region
          %s1473 = sand.u32 %s275, 1
          %s1474 = scalar_lea.sflag [#allocation3], %s1473
          %s1475 = sand.u32 %s275, 1
          %s1476 = smul.addr %s1475, 8
          %s1477 = scalar_lea.vmem [#allocation2], %s1476
          %1478 = dma.done %s1474, 128
        $region76: #{encoder_decoder_forward.1} parent=71 // pred_fallthru
          _
      $region72: #{encoder_decoder_forward.1} parent=5 // pred_fallthru
        _
    $region6: #{encoder_decoder_forward.1} parent=1 // loop_footer
      %s24 = sadd.s32 1, %s20
    $region7: #{encoder_decoder_forward.1} parent=1 // loop_footer_branch
      %19 = sbr.rel target = $region3
    $region8: #{encoder_decoder_forward.1} parent=1 // loop_exit
      _
    %1479 = vsyncpa [#allocation3], 1
    %s1480 = scalar_lea.sflag [#allocation3], 1
    %1481 = vsyncpa %s1480, 1

</llo_original>
